<compile_context>
chip_gen: v5e
topology: v5e:2x2
jax: 0.10.0
libtpu: 0.0.40
codegen_flags: <defaults>
</compile_context>

<pallas_src>
import functools

import jax
import jax.numpy as jnp
from jax import lax
from jax.experimental import pallas as pl
from jax.experimental.pallas import tpu as pltpu


# ---------------------------------------------------------------------------
# In-kernel helper: conv3x3 ('same', no bias) + folded-BN shift + PReLU,
# computed as a single im2col matmul on a zero-padded VMEM tile.
# ---------------------------------------------------------------------------
def _im2col_conv_block(src_ref, cols_ref, w_ref, ss_ref, Hh, Wh, cin):
    """src_ref : (Hh+2, Wh+2, cin) zero-padded input tile (halo already zero)
       cols_ref: (Hh, Wh, 9*cin)   im2col staging buffer (VMEM scratch)
       w_ref   : (9*cin, cout)     conv weights, BN scale pre-folded (compute dtype)
       ss_ref  : (2, cout)         row 0 = BN shift, row 1 = PReLU alpha (f32)
       returns : (Hh*Wh, cout) float32
    """
    # im2col: the 9 shifted taps side-by-side on the lane axis -> one MXU
    # matmul with K = 9*cin instead of 9 tiny K = cin matmuls.
    for t, (dy, dx) in enumerate([(dy, dx) for dy in range(3) for dx in range(3)]):
        cols_ref[:, :, t * cin:(t + 1) * cin] = src_ref[dy:dy + Hh, dx:dx + Wh, :]
    cols = cols_ref[...].reshape(Hh * Wh, 9 * cin)
    y = jnp.dot(cols, w_ref[...], preferred_element_type=jnp.float32)

    shift = ss_ref[0:1, :].astype(jnp.float32)      # folded BatchNorm (eval)
    alpha = ss_ref[1:2, :].astype(jnp.float32)      # per-channel PReLU
    y = y + shift
    return jnp.where(y >= 0.0, y, alpha * y)        # (Hh*Wh, cout) f32


# ---------------------------------------------------------------------------
# Fused kernel: maxpool2x2 -> [conv+BN+PReLU] -> [conv+BN+PReLU]
# ---------------------------------------------------------------------------
def _down_fused_kernel(x_ref, w1_ref, ss1_ref, w2_ref, ss2_ref, o_ref,
                       xpad1_ref, xpad2_ref, cols1_ref, cols2_ref,
                       *, Hh, Wh, Cin, Cmid, Cout):
    # Zero-fill the padded scratch buffers so the 1-pixel halo provides the
    # conv's "same" padding (only the halo strictly needs it; the buffers are
    # tiny relative to the conv work).
    xpad1_ref[...] = jnp.zeros(xpad1_ref.shape, xpad1_ref.dtype)
    xpad2_ref[...] = jnp.zeros(xpad2_ref.shape, xpad2_ref.dtype)

    # --- 2x2 / stride-2 max pool, fused into block1's input stage (VPU only).
    # The input arrives host-reshaped to (1, Hh, 2, Wh, 2*Cin), so the four
    # pooling phases are leading-dim indices + contiguous lane slices, combined
    # with elementwise maxima (no XLU reductions, no strided access).
    x_even = x_ref[0, :, 0, :, :]                           # (Hh, Wh, 2*Cin)
    x_odd = x_ref[0, :, 1, :, :]                            # (Hh, Wh, 2*Cin)
    xh = jnp.maximum(x_even, x_odd)
    pooled = jnp.maximum(xh[:, :, :Cin], xh[:, :, Cin:])    # (Hh, Wh, Cin)
    xpad1_ref[1:Hh + 1, 1:Wh + 1, :] = pooled.astype(xpad1_ref.dtype)

    # --- conv block 1: result stays in VMEM (no HBM round-trip).
    y1 = _im2col_conv_block(xpad1_ref, cols1_ref, w1_ref, ss1_ref, Hh, Wh, Cin)
    xpad2_ref[1:Hh + 1, 1:Wh + 1, :] = y1.reshape(Hh, Wh, Cmid).astype(xpad2_ref.dtype)

    # --- conv block 2: single HBM write of the final activation.
    y2 = _im2col_conv_block(xpad2_ref, cols2_ref, w2_ref, ss2_ref, Hh, Wh, Cmid)
    o_ref[0] = y2.reshape(Hh, Wh, Cout).astype(o_ref.dtype)


# ---------------------------------------------------------------------------
# Wrappers
# ---------------------------------------------------------------------------
def down_forward_nhwc(x_nhwc, params, compute_dtype=None, eps=1e-5):
    """Fused Down block on NHWC activations.  compute_dtype=jnp.bfloat16 is the
    fast path on v6e/v7x (f32 accumulation is kept inside the kernel)."""
    out_dtype = x_nhwc.dtype
    if compute_dtype is None:
        compute_dtype = out_dtype

    N, H, W, Cin = x_nhwc.shape
    H2, W2 = (H // 2) * 2, (W // 2) * 2           # MaxPool2d(2) floors odd dims
    if (H2, W2) != (H, W):
        x_nhwc = x_nhwc[:, :H2, :W2, :]
    Hh, Wh = H2 // 2, W2 // 2

    def prep(p):
        cin, cout = p["w_hwio"].shape[2], p["w_hwio"].shape[3]
        inv_std = 1.0 / jnp.sqrt(p["bn_var"] + eps)
        scale = p["bn_gamma"] * inv_std
        # Fold the BN scale into the conv weights (host side, once).
        w = (p["w_hwio"] * scale).reshape(9 * cin, cout).astype(compute_dtype)
        shift = p["bn_beta"] - p["bn_mean"] * scale
        ss = jnp.stack([shift, p["alpha"]]).astype(jnp.float32)     # (2, cout)
        return w, ss

    w1, ss1 = prep(params["block1"])
    w2, ss2 = prep(params["block2"])
    Cmid, Cout = w1.shape[1], w2.shape[1]

    # Free row-major reinterpretation: exposes the 2x2 pooling phases as plain
    # slices inside the kernel.
    x_in = x_nhwc.astype(compute_dtype).reshape(N, Hh, 2, Wh, 2 * Cin)

    kernel = functools.partial(_down_fused_kernel, Hh=Hh, Wh=Wh,
                               Cin=Cin, Cmid=Cmid, Cout=Cout)
    return pl.pallas_call(
        kernel,
        out_shape=jax.ShapeDtypeStruct((N, Hh, Wh, Cout), out_dtype),
        grid=(N,),
        in_specs=[
            pl.BlockSpec((1, Hh, 2, Wh, 2 * Cin), lambda n: (n, 0, 0, 0, 0)),
            pl.BlockSpec((9 * Cin, Cmid), lambda n: (0, 0)),
            pl.BlockSpec((2, Cmid), lambda n: (0, 0)),
            pl.BlockSpec((9 * Cmid, Cout), lambda n: (0, 0)),
            pl.BlockSpec((2, Cout), lambda n: (0, 0)),
        ],
        out_specs=pl.BlockSpec((1, Hh, Wh, Cout), lambda n: (n, 0, 0, 0)),
        scratch_shapes=[
            pltpu.VMEM((Hh + 2, Wh + 2, Cin), compute_dtype),    # padded pooled x
            pltpu.VMEM((Hh + 2, Wh + 2, Cmid), compute_dtype),   # padded block1 out
            pltpu.VMEM((Hh, Wh, 9 * Cin), compute_dtype),        # im2col buf 1
            pltpu.VMEM((Hh, Wh, 9 * Cmid), compute_dtype),       # im2col buf 2
        ],
        compiler_params=pltpu.CompilerParams(
            dimension_semantics=("parallel",),
            vmem_limit_bytes=32 * 1024 * 1024),
    )(x_in, w1, ss1, w2, ss2)


def down_forward(x_nchw, params, compute_dtype=None):
    # NOTE: in a full U-Net keep activations NHWC end-to-end and call
    # down_forward_nhwc directly; these transposes exist only to match the
    # PyTorch NCHW interface at the module boundary.
    x = jnp.transpose(x_nchw, (0, 2, 3, 1))
    y = down_forward_nhwc(x, params, compute_dtype=compute_dtype)
    return jnp.transpose(y, (0, 3, 1, 2))


def init_params(key, in_ch, out_ch):
    mid = out_ch  # mid_channels defaults to out_channels in DoubleConv

    def block(k, cin, cout):
        kw, kg, kb, km, kv = jax.random.split(k, 5)
        return dict(
            w_hwio=0.1 * jax.random.normal(kw, (3, 3, cin, cout), jnp.float32),
            bn_gamma=1.0 + 0.1 * jax.random.normal(kg, (cout,), jnp.float32),
            bn_beta=0.1 * jax.random.normal(kb, (cout,), jnp.float32),
            bn_mean=0.1 * jax.random.normal(km, (cout,), jnp.float32),
            bn_var=1.0 + 0.1 * jax.random.uniform(kv, (cout,), jnp.float32),
            alpha=jnp.full((cout,), 0.25, jnp.float32),  # PReLU default init
        )

    k1, k2 = jax.random.split(key)
    return {"block1": block(k1, in_ch, mid), "block2": block(k2, mid, out_ch)}


# Pure-JAX reference (numerical sanity check).
def ref_forward(x_nchw, params, eps=1e-5):
    x = jnp.transpose(x_nchw, (0, 2, 3, 1))
    N, H, W, C = x.shape
    H2, W2 = (H // 2) * 2, (W // 2) * 2
    x = x[:, :H2, :W2, :]
    x = x.reshape(N, H2 // 2, 2, W2 // 2, 2, C).max(axis=(2, 4))
    for name in ("block1", "block2"):
        p = params[name]
        y = lax.conv_general_dilated(
            x, p["w_hwio"], window_strides=(1, 1), padding="SAME",
            dimension_numbers=("NHWC", "HWIO", "NHWC"))
        scale = p["bn_gamma"] / jnp.sqrt(p["bn_var"] + eps)
        y = y * scale + (p["bn_beta"] - p["bn_mean"] * scale)
        x = jnp.where(y >= 0, y, p["alpha"] * y)
    return jnp.transpose(x, (0, 3, 1, 2))


if __name__ == "__main__":
    key = jax.random.PRNGKey(0)
    kx, kp = jax.random.split(key)

    in_channels, out_channels = 4, 8
    x = jax.random.normal(kx, (2, in_channels, 16, 16), jnp.float32)   # NCHW
    params = init_params(kp, in_channels, out_channels)

    ref = jax.block_until_ready(ref_forward(x, params))

    # f32 compute path (exact semantics).
    out = jax.block_until_ready(down_forward(x, params))
    assert out.shape == (2, out_channels, 8, 8), out.shape
    assert jnp.allclose(out, ref, rtol=1e-3, atol=1e-3), (
        float(jnp.max(jnp.abs(out - ref))))

    # bf16 compute path (v6e/v7x MXU fast path, f32 accumulation): loose check.
    out_bf16 = jax.block_until_ready(
        down_forward(x, params, compute_dtype=jnp.bfloat16))
    assert out_bf16.shape == (2, out_channels, 8, 8), out_bf16.shape
    rel = float(jnp.linalg.norm(out_bf16 - ref) / jnp.linalg.norm(ref))
    assert rel < 3e-2, rel

    print("KERNEL_OK")
</pallas_src>

<mosaic_0001>
module attributes {stable_mosaic.version = 11 : i64} {
  func.func @_down_fused_kernel(%arg0: i32, %arg1: memref<1x8x2x8x8xf32, #tpu.memory_space<vmem>>, %arg2: memref<36x8xf32, #tpu.memory_space<vmem>>, %arg3: memref<2x8xf32, #tpu.memory_space<vmem>>, %arg4: memref<72x8xf32, #tpu.memory_space<vmem>>, %arg5: memref<2x8xf32, #tpu.memory_space<vmem>>, %arg6: memref<1x8x8x8xf32, #tpu.memory_space<vmem>>, %arg7: memref<10x10x4xf32, #tpu.memory_space<vmem>>, %arg8: memref<10x10x8xf32, #tpu.memory_space<vmem>>, %arg9: memref<8x8x36xf32, #tpu.memory_space<vmem>>, %arg10: memref<8x8x72xf32, #tpu.memory_space<vmem>>) attributes {dimension_semantics = [#tpu.dimension_semantics<parallel>], iteration_bounds = array<i64: 2>, scalar_prefetch = 0 : i64, scratch_operands = 4 : i64, tpu.core_type = #tpu.core_type<tc>, window_params = [{transform_indices = @transform_0, window_bounds = array<i64: 1, 8, 2, 8, 8>}, {pipeline_mode = #tpu.pipeline_mode<synchronous>, transform_indices = @transform_1, window_bounds = array<i64: 36, 8>}, {pipeline_mode = #tpu.pipeline_mode<synchronous>, transform_indices = @transform_2, window_bounds = array<i64: 2, 8>}, {pipeline_mode = #tpu.pipeline_mode<synchronous>, transform_indices = @transform_3, window_bounds = array<i64: 72, 8>}, {pipeline_mode = #tpu.pipeline_mode<synchronous>, transform_indices = @transform_4, window_bounds = array<i64: 2, 8>}, {transform_indices = @transform_5, window_bounds = array<i64: 1, 8, 8, 8>}]} {
    %cst = arith.constant 0.000000e+00 : f32
    %0 = vector.broadcast %cst : f32 to vector<10x10x4xf32>
    %c0 = arith.constant 0 : index
    %c0_0 = arith.constant 0 : index
    %c0_1 = arith.constant 0 : index
    %1 = vector.load %arg7[%c0, %c0_0, %c0_1] : memref<10x10x4xf32, #tpu.memory_space<vmem>>, vector<10x10x4xf32>
    tpu.vector_store %arg7[%c0, %c0_0, %c0_1], %0 {strides = array<i32>} : memref<10x10x4xf32, #tpu.memory_space<vmem>>, vector<10x10x4xf32>,
    %cst_2 = arith.constant 0.000000e+00 : f32
    %2 = vector.broadcast %cst_2 : f32 to vector<10x10x8xf32>
    %c0_3 = arith.constant 0 : index
    %c0_4 = arith.constant 0 : index
    %c0_5 = arith.constant 0 : index
    %3 = vector.load %arg8[%c0_3, %c0_4, %c0_5] : memref<10x10x8xf32, #tpu.memory_space<vmem>>, vector<10x10x8xf32>
    tpu.vector_store %arg8[%c0_3, %c0_4, %c0_5], %2 {strides = array<i32>} : memref<10x10x8xf32, #tpu.memory_space<vmem>>, vector<10x10x8xf32>,
    %c0_6 = arith.constant 0 : index
    %c0_7 = arith.constant 0 : index
    %c0_8 = arith.constant 0 : index
    %c0_9 = arith.constant 0 : index
    %c0_10 = arith.constant 0 : index
    %4 = vector.load %arg1[%c0_6, %c0_7, %c0_8, %c0_9, %c0_10] : memref<1x8x2x8x8xf32, #tpu.memory_space<vmem>>, vector<1x8x1x8x8xf32>
    %5 = vector.shape_cast %4 : vector<1x8x1x8x8xf32> to vector<8x8x8xf32>
    %c0_11 = arith.constant 0 : index
    %c0_12 = arith.constant 0 : index
    %c1 = arith.constant 1 : index
    %c0_13 = arith.constant 0 : index
    %c0_14 = arith.constant 0 : index
    %6 = vector.load %arg1[%c0_11, %c0_12, %c1, %c0_13, %c0_14] : memref<1x8x2x8x8xf32, #tpu.memory_space<vmem>>, vector<1x8x1x8x8xf32>
    %7 = vector.shape_cast %6 : vector<1x8x1x8x8xf32> to vector<8x8x8xf32>
    %8 = arith.maximumf %5, %7 : vector<8x8x8xf32>
    %9 = vector.extract_strided_slice %8 {offsets = [0, 0, 0], sizes = [8, 8, 4], strides = [1, 1, 1]} : vector<8x8x8xf32> to vector<8x8x4xf32>
    %10 = vector.extract_strided_slice %8 {offsets = [0, 0, 4], sizes = [8, 8, 4], strides = [1, 1, 1]} : vector<8x8x8xf32> to vector<8x8x4xf32>
    %11 = arith.maximumf %9, %10 : vector<8x8x4xf32>
    %c1_15 = arith.constant 1 : index
    %c1_16 = arith.constant 1 : index
    %c0_17 = arith.constant 0 : index
    %12 = vector.load %arg7[%c1_15, %c1_16, %c0_17] : memref<10x10x4xf32, #tpu.memory_space<vmem>>, vector<8x8x4xf32>
    tpu.vector_store %arg7[%c1_15, %c1_16, %c0_17], %11 {strides = array<i32>} : memref<10x10x4xf32, #tpu.memory_space<vmem>>, vector<8x8x4xf32>,
    %c0_18 = arith.constant 0 : index
    %c0_19 = arith.constant 0 : index
    %c0_20 = arith.constant 0 : index
    %13 = vector.load %arg7[%c0_18, %c0_19, %c0_20] : memref<10x10x4xf32, #tpu.memory_space<vmem>>, vector<8x8x4xf32>
    %c0_21 = arith.constant 0 : index
    %c0_22 = arith.constant 0 : index
    %c0_23 = arith.constant 0 : index
    %14 = vector.load %arg9[%c0_21, %c0_22, %c0_23] : memref<8x8x36xf32, #tpu.memory_space<vmem>>, vector<8x8x4xf32>
    tpu.vector_store %arg9[%c0_21, %c0_22, %c0_23], %13 {strides = array<i32>} : memref<8x8x36xf32, #tpu.memory_space<vmem>>, vector<8x8x4xf32>,
    %c0_24 = arith.constant 0 : index
    %c1_25 = arith.constant 1 : index
    %c0_26 = arith.constant 0 : index
    %15 = vector.load %arg7[%c0_24, %c1_25, %c0_26] : memref<10x10x4xf32, #tpu.memory_space<vmem>>, vector<8x8x4xf32>
    %c0_27 = arith.constant 0 : index
    %c0_28 = arith.constant 0 : index
    %c4 = arith.constant 4 : index
    %16 = vector.load %arg9[%c0_27, %c0_28, %c4] : memref<8x8x36xf32, #tpu.memory_space<vmem>>, vector<8x8x4xf32>
    tpu.vector_store %arg9[%c0_27, %c0_28, %c4], %15 {strides = array<i32>} : memref<8x8x36xf32, #tpu.memory_space<vmem>>, vector<8x8x4xf32>,
    %c0_29 = arith.constant 0 : index
    %c2 = arith.constant 2 : index
    %c0_30 = arith.constant 0 : index
    %17 = vector.load %arg7[%c0_29, %c2, %c0_30] : memref<10x10x4xf32, #tpu.memory_space<vmem>>, vector<8x8x4xf32>
    %c0_31 = arith.constant 0 : index
    %c0_32 = arith.constant 0 : index
    %c8 = arith.constant 8 : index
    %18 = vector.load %arg9[%c0_31, %c0_32, %c8] : memref<8x8x36xf32, #tpu.memory_space<vmem>>, vector<8x8x4xf32>
    tpu.vector_store %arg9[%c0_31, %c0_32, %c8], %17 {strides = array<i32>} : memref<8x8x36xf32, #tpu.memory_space<vmem>>, vector<8x8x4xf32>,
    %c1_33 = arith.constant 1 : index
    %c0_34 = arith.constant 0 : index
    %c0_35 = arith.constant 0 : index
    %19 = vector.load %arg7[%c1_33, %c0_34, %c0_35] : memref<10x10x4xf32, #tpu.memory_space<vmem>>, vector<8x8x4xf32>
    %c0_36 = arith.constant 0 : index
    %c0_37 = arith.constant 0 : index
    %c12 = arith.constant 12 : index
    %20 = vector.load %arg9[%c0_36, %c0_37, %c12] : memref<8x8x36xf32, #tpu.memory_space<vmem>>, vector<8x8x4xf32>
    tpu.vector_store %arg9[%c0_36, %c0_37, %c12], %19 {strides = array<i32>} : memref<8x8x36xf32, #tpu.memory_space<vmem>>, vector<8x8x4xf32>,
    %c1_38 = arith.constant 1 : index
    %c1_39 = arith.constant 1 : index
    %c0_40 = arith.constant 0 : index
    %21 = vector.load %arg7[%c1_38, %c1_39, %c0_40] : memref<10x10x4xf32, #tpu.memory_space<vmem>>, vector<8x8x4xf32>
    %c0_41 = arith.constant 0 : index
    %c0_42 = arith.constant 0 : index
    %c16 = arith.constant 16 : index
    %22 = vector.load %arg9[%c0_41, %c0_42, %c16] : memref<8x8x36xf32, #tpu.memory_space<vmem>>, vector<8x8x4xf32>
    tpu.vector_store %arg9[%c0_41, %c0_42, %c16], %21 {strides = array<i32>} : memref<8x8x36xf32, #tpu.memory_space<vmem>>, vector<8x8x4xf32>,
    %c1_43 = arith.constant 1 : index
    %c2_44 = arith.constant 2 : index
    %c0_45 = arith.constant 0 : index
    %23 = vector.load %arg7[%c1_43, %c2_44, %c0_45] : memref<10x10x4xf32, #tpu.memory_space<vmem>>, vector<8x8x4xf32>
    %c0_46 = arith.constant 0 : index
    %c0_47 = arith.constant 0 : index
    %c20 = arith.constant 20 : index
    %24 = vector.load %arg9[%c0_46, %c0_47, %c20] : memref<8x8x36xf32, #tpu.memory_space<vmem>>, vector<8x8x4xf32>
    tpu.vector_store %arg9[%c0_46, %c0_47, %c20], %23 {strides = array<i32>} : memref<8x8x36xf32, #tpu.memory_space<vmem>>, vector<8x8x4xf32>,
    %c2_48 = arith.constant 2 : index
    %c0_49 = arith.constant 0 : index
    %c0_50 = arith.constant 0 : index
    %25 = vector.load %arg7[%c2_48, %c0_49, %c0_50] : memref<10x10x4xf32, #tpu.memory_space<vmem>>, vector<8x8x4xf32>
    %c0_51 = arith.constant 0 : index
    %c0_52 = arith.constant 0 : index
    %c24 = arith.constant 24 : index
    %26 = vector.load %arg9[%c0_51, %c0_52, %c24] : memref<8x8x36xf32, #tpu.memory_space<vmem>>, vector<8x8x4xf32>
    tpu.vector_store %arg9[%c0_51, %c0_52, %c24], %25 {strides = array<i32>} : memref<8x8x36xf32, #tpu.memory_space<vmem>>, vector<8x8x4xf32>,
    %c2_53 = arith.constant 2 : index
    %c1_54 = arith.constant 1 : index
    %c0_55 = arith.constant 0 : index
    %27 = vector.load %arg7[%c2_53, %c1_54, %c0_55] : memref<10x10x4xf32, #tpu.memory_space<vmem>>, vector<8x8x4xf32>
    %c0_56 = arith.constant 0 : index
    %c0_57 = arith.constant 0 : index
    %c28 = arith.constant 28 : index
    %28 = vector.load %arg9[%c0_56, %c0_57, %c28] : memref<8x8x36xf32, #tpu.memory_space<vmem>>, vector<8x8x4xf32>
    tpu.vector_store %arg9[%c0_56, %c0_57, %c28], %27 {strides = array<i32>} : memref<8x8x36xf32, #tpu.memory_space<vmem>>, vector<8x8x4xf32>,
    %c2_58 = arith.constant 2 : index
    %c2_59 = arith.constant 2 : index
    %c0_60 = arith.constant 0 : index
    %29 = vector.load %arg7[%c2_58, %c2_59, %c0_60] : memref<10x10x4xf32, #tpu.memory_space<vmem>>, vector<8x8x4xf32>
    %c0_61 = arith.constant 0 : index
    %c0_62 = arith.constant 0 : index
    %c32 = arith.constant 32 : index
    %30 = vector.load %arg9[%c0_61, %c0_62, %c32] : memref<8x8x36xf32, #tpu.memory_space<vmem>>, vector<8x8x4xf32>
    tpu.vector_store %arg9[%c0_61, %c0_62, %c32], %29 {strides = array<i32>} : memref<8x8x36xf32, #tpu.memory_space<vmem>>, vector<8x8x4xf32>,
    %c0_63 = arith.constant 0 : index
    %c0_64 = arith.constant 0 : index
    %c0_65 = arith.constant 0 : index
    %31 = vector.load %arg9[%c0_63, %c0_64, %c0_65] : memref<8x8x36xf32, #tpu.memory_space<vmem>>, vector<8x8x36xf32>
    %32 = vector.shape_cast %31 : vector<8x8x36xf32> to vector<64x36xf32>
    %c0_66 = arith.constant 0 : index
    %c0_67 = arith.constant 0 : index
    %33 = vector.load %arg2[%c0_66, %c0_67] : memref<36x8xf32, #tpu.memory_space<vmem>>, vector<36x8xf32>
    %cst_68 = arith.constant dense<0.000000e+00> : vector<64x8xf32>
    %34 = tpu.matmul %32, %33, %cst_68 {dimension_numbers = #tpu.dot_dimension_numbers<[1], [0], [0], [1], [0, 0, 1, 1], [], []>} : vector<64x36xf32>, vector<36x8xf32>, vector<64x8xf32> -> vector<64x8xf32>
    %c0_69 = arith.constant 0 : index
    %c0_70 = arith.constant 0 : index
    %35 = vector.load %arg3[%c0_69, %c0_70] : memref<2x8xf32, #tpu.memory_space<vmem>>, vector<1x8xf32>
    %c1_71 = arith.constant 1 : index
    %c0_72 = arith.constant 0 : index
    %36 = vector.load %arg3[%c1_71, %c0_72] : memref<2x8xf32, #tpu.memory_space<vmem>>, vector<1x8xf32>
    %37 = vector.broadcast %35 : vector<1x8xf32> to vector<64x8xf32>
    %38 = arith.addf %34, %37 : vector<64x8xf32>
    %cst_73 = arith.constant 0.000000e+00 : f32
    %39 = vector.broadcast %cst_73 : f32 to vector<64x8xf32>
    %40 = arith.cmpf oge, %38, %39 : vector<64x8xf32>
    %41 = vector.broadcast %36 : vector<1x8xf32> to vector<64x8xf32>
    %42 = arith.mulf %41, %38 : vector<64x8xf32>
    %43 = arith.select %40, %38, %42 : vector<64x8xi1>, vector<64x8xf32>
    %44 = vector.shape_cast %43 : vector<64x8xf32> to vector<8x8x8xf32>
    %c1_74 = arith.constant 1 : index
    %c1_75 = arith.constant 1 : index
    %c0_76 = arith.constant 0 : index
    %45 = vector.load %arg8[%c1_74, %c1_75, %c0_76] : memref<10x10x8xf32, #tpu.memory_space<vmem>>, vector<8x8x8xf32>
    tpu.vector_store %arg8[%c1_74, %c1_75, %c0_76], %44 {strides = array<i32>} : memref<10x10x8xf32, #tpu.memory_space<vmem>>, vector<8x8x8xf32>,
    %c0_77 = arith.constant 0 : index
    %c0_78 = arith.constant 0 : index
    %c0_79 = arith.constant 0 : index
    %46 = vector.load %arg8[%c0_77, %c0_78, %c0_79] : memref<10x10x8xf32, #tpu.memory_space<vmem>>, vector<8x8x8xf32>
    %c0_80 = arith.constant 0 : index
    %c0_81 = arith.constant 0 : index
    %c0_82 = arith.constant 0 : index
    %47 = vector.load %arg10[%c0_80, %c0_81, %c0_82] : memref<8x8x72xf32, #tpu.memory_space<vmem>>, vector<8x8x8xf32>
    tpu.vector_store %arg10[%c0_80, %c0_81, %c0_82], %46 {strides = array<i32>} : memref<8x8x72xf32, #tpu.memory_space<vmem>>, vector<8x8x8xf32>,
    %c0_83 = arith.constant 0 : index
    %c1_84 = arith.constant 1 : index
    %c0_85 = arith.constant 0 : index
    %48 = vector.load %arg8[%c0_83, %c1_84, %c0_85] : memref<10x10x8xf32, #tpu.memory_space<vmem>>, vector<8x8x8xf32>
    %c0_86 = arith.constant 0 : index
    %c0_87 = arith.constant 0 : index
    %c8_88 = arith.constant 8 : index
    %49 = vector.load %arg10[%c0_86, %c0_87, %c8_88] : memref<8x8x72xf32, #tpu.memory_space<vmem>>, vector<8x8x8xf32>
    tpu.vector_store %arg10[%c0_86, %c0_87, %c8_88], %48 {strides = array<i32>} : memref<8x8x72xf32, #tpu.memory_space<vmem>>, vector<8x8x8xf32>,
    %c0_89 = arith.constant 0 : index
    %c2_90 = arith.constant 2 : index
    %c0_91 = arith.constant 0 : index
    %50 = vector.load %arg8[%c0_89, %c2_90, %c0_91] : memref<10x10x8xf32, #tpu.memory_space<vmem>>, vector<8x8x8xf32>
    %c0_92 = arith.constant 0 : index
    %c0_93 = arith.constant 0 : index
    %c16_94 = arith.constant 16 : index
    %51 = vector.load %arg10[%c0_92, %c0_93, %c16_94] : memref<8x8x72xf32, #tpu.memory_space<vmem>>, vector<8x8x8xf32>
    tpu.vector_store %arg10[%c0_92, %c0_93, %c16_94], %50 {strides = array<i32>} : memref<8x8x72xf32, #tpu.memory_space<vmem>>, vector<8x8x8xf32>,
    %c1_95 = arith.constant 1 : index
    %c0_96 = arith.constant 0 : index
    %c0_97 = arith.constant 0 : index
    %52 = vector.load %arg8[%c1_95, %c0_96, %c0_97] : memref<10x10x8xf32, #tpu.memory_space<vmem>>, vector<8x8x8xf32>
    %c0_98 = arith.constant 0 : index
    %c0_99 = arith.constant 0 : index
    %c24_100 = arith.constant 24 : index
    %53 = vector.load %arg10[%c0_98, %c0_99, %c24_100] : memref<8x8x72xf32, #tpu.memory_space<vmem>>, vector<8x8x8xf32>
    tpu.vector_store %arg10[%c0_98, %c0_99, %c24_100], %52 {strides = array<i32>} : memref<8x8x72xf32, #tpu.memory_space<vmem>>, vector<8x8x8xf32>,
    %c1_101 = arith.constant 1 : index
    %c1_102 = arith.constant 1 : index
    %c0_103 = arith.constant 0 : index
    %54 = vector.load %arg8[%c1_101, %c1_102, %c0_103] : memref<10x10x8xf32, #tpu.memory_space<vmem>>, vector<8x8x8xf32>
    %c0_104 = arith.constant 0 : index
    %c0_105 = arith.constant 0 : index
    %c32_106 = arith.constant 32 : index
    %55 = vector.load %arg10[%c0_104, %c0_105, %c32_106] : memref<8x8x72xf32, #tpu.memory_space<vmem>>, vector<8x8x8xf32>
    tpu.vector_store %arg10[%c0_104, %c0_105, %c32_106], %54 {strides = array<i32>} : memref<8x8x72xf32, #tpu.memory_space<vmem>>, vector<8x8x8xf32>,
    %c1_107 = arith.constant 1 : index
    %c2_108 = arith.constant 2 : index
    %c0_109 = arith.constant 0 : index
    %56 = vector.load %arg8[%c1_107, %c2_108, %c0_109] : memref<10x10x8xf32, #tpu.memory_space<vmem>>, vector<8x8x8xf32>
    %c0_110 = arith.constant 0 : index
    %c0_111 = arith.constant 0 : index
    %c40 = arith.constant 40 : index
    %57 = vector.load %arg10[%c0_110, %c0_111, %c40] : memref<8x8x72xf32, #tpu.memory_space<vmem>>, vector<8x8x8xf32>
    tpu.vector_store %arg10[%c0_110, %c0_111, %c40], %56 {strides = array<i32>} : memref<8x8x72xf32, #tpu.memory_space<vmem>>, vector<8x8x8xf32>,
    %c2_112 = arith.constant 2 : index
    %c0_113 = arith.constant 0 : index
    %c0_114 = arith.constant 0 : index
    %58 = vector.load %arg8[%c2_112, %c0_113, %c0_114] : memref<10x10x8xf32, #tpu.memory_space<vmem>>, vector<8x8x8xf32>
    %c0_115 = arith.constant 0 : index
    %c0_116 = arith.constant 0 : index
    %c48 = arith.constant 48 : index
    %59 = vector.load %arg10[%c0_115, %c0_116, %c48] : memref<8x8x72xf32, #tpu.memory_space<vmem>>, vector<8x8x8xf32>
    tpu.vector_store %arg10[%c0_115, %c0_116, %c48], %58 {strides = array<i32>} : memref<8x8x72xf32, #tpu.memory_space<vmem>>, vector<8x8x8xf32>,
    %c2_117 = arith.constant 2 : index
    %c1_118 = arith.constant 1 : index
    %c0_119 = arith.constant 0 : index
    %60 = vector.load %arg8[%c2_117, %c1_118, %c0_119] : memref<10x10x8xf32, #tpu.memory_space<vmem>>, vector<8x8x8xf32>
    %c0_120 = arith.constant 0 : index
    %c0_121 = arith.constant 0 : index
    %c56 = arith.constant 56 : index
    %61 = vector.load %arg10[%c0_120, %c0_121, %c56] : memref<8x8x72xf32, #tpu.memory_space<vmem>>, vector<8x8x8xf32>
    tpu.vector_store %arg10[%c0_120, %c0_121, %c56], %60 {strides = array<i32>} : memref<8x8x72xf32, #tpu.memory_space<vmem>>, vector<8x8x8xf32>,
    %c2_122 = arith.constant 2 : index
    %c2_123 = arith.constant 2 : index
    %c0_124 = arith.constant 0 : index
    %62 = vector.load %arg8[%c2_122, %c2_123, %c0_124] : memref<10x10x8xf32, #tpu.memory_space<vmem>>, vector<8x8x8xf32>
    %c0_125 = arith.constant 0 : index
    %c0_126 = arith.constant 0 : index
    %c64 = arith.constant 64 : index
    %63 = vector.load %arg10[%c0_125, %c0_126, %c64] : memref<8x8x72xf32, #tpu.memory_space<vmem>>, vector<8x8x8xf32>
    tpu.vector_store %arg10[%c0_125, %c0_126, %c64], %62 {strides = array<i32>} : memref<8x8x72xf32, #tpu.memory_space<vmem>>, vector<8x8x8xf32>,
    %c0_127 = arith.constant 0 : index
    %c0_128 = arith.constant 0 : index
    %c0_129 = arith.constant 0 : index
    %64 = vector.load %arg10[%c0_127, %c0_128, %c0_129] : memref<8x8x72xf32, #tpu.memory_space<vmem>>, vector<8x8x72xf32>
    %65 = vector.shape_cast %64 : vector<8x8x72xf32> to vector<64x72xf32>
    %c0_130 = arith.constant 0 : index
    %c0_131 = arith.constant 0 : index
    %66 = vector.load %arg4[%c0_130, %c0_131] : memref<72x8xf32, #tpu.memory_space<vmem>>, vector<72x8xf32>
    %cst_132 = arith.constant dense<0.000000e+00> : vector<64x8xf32>
    %67 = tpu.matmul %65, %66, %cst_132 {dimension_numbers = #tpu.dot_dimension_numbers<[1], [0], [0], [1], [0, 0, 1, 1], [], []>} : vector<64x72xf32>, vector<72x8xf32>, vector<64x8xf32> -> vector<64x8xf32>
    %c0_133 = arith.constant 0 : index
    %c0_134 = arith.constant 0 : index
    %68 = vector.load %arg5[%c0_133, %c0_134] : memref<2x8xf32, #tpu.memory_space<vmem>>, vector<1x8xf32>
    %c1_135 = arith.constant 1 : index
    %c0_136 = arith.constant 0 : index
    %69 = vector.load %arg5[%c1_135, %c0_136] : memref<2x8xf32, #tpu.memory_space<vmem>>, vector<1x8xf32>
    %70 = vector.broadcast %68 : vector<1x8xf32> to vector<64x8xf32>
    %71 = arith.addf %67, %70 : vector<64x8xf32>
    %cst_137 = arith.constant 0.000000e+00 : f32
    %72 = vector.broadcast %cst_137 : f32 to vector<64x8xf32>
    %73 = arith.cmpf oge, %71, %72 : vector<64x8xf32>
    %74 = vector.broadcast %69 : vector<1x8xf32> to vector<64x8xf32>
    %75 = arith.mulf %74, %71 : vector<64x8xf32>
    %76 = arith.select %73, %71, %75 : vector<64x8xi1>, vector<64x8xf32>
    %77 = vector.shape_cast %76 : vector<64x8xf32> to vector<8x8x8xf32>
    %c0_138 = arith.constant 0 : index
    %c0_139 = arith.constant 0 : index
    %c0_140 = arith.constant 0 : index
    %c0_141 = arith.constant 0 : index
    %78 = vector.load %arg6[%c0_138, %c0_139, %c0_140, %c0_141] : memref<1x8x8x8xf32, #tpu.memory_space<vmem>>, vector<1x8x8x8xf32>
    %79 = vector.shape_cast %78 : vector<1x8x8x8xf32> to vector<8x8x8xf32>
    %80 = vector.shape_cast %77 : vector<8x8x8xf32> to vector<1x8x8x8xf32>
    tpu.vector_store %arg6[%c0_138, %c0_139, %c0_140, %c0_141], %80 {strides = array<i32>} : memref<1x8x8x8xf32, #tpu.memory_space<vmem>>, vector<1x8x8x8xf32>,
    return
  }
  func.func @transform_0(%arg0: i32) -> (i32, i32, i32, i32, i32) {
    %c0_i32 = arith.constant 0 : i32
    %c0_i32_0 = arith.constant 0 : i32
    %c0_i32_1 = arith.constant 0 : i32
    %c0_i32_2 = arith.constant 0 : i32
    %c0_i32_3 = arith.constant 0 : i32
    return %arg0, %c0_i32, %c0_i32_0, %c0_i32_1, %c0_i32_2 : i32, i32, i32, i32, i32
  }
  func.func @transform_1(%arg0: i32) -> (i32, i32) {
    %c0_i32 = arith.constant 0 : i32
    %c0_i32_0 = arith.constant 0 : i32
    %c0_i32_1 = arith.constant 0 : i32
    return %c0_i32, %c0_i32_0 : i32, i32
  }
  func.func @transform_2(%arg0: i32) -> (i32, i32) {
    %c0_i32 = arith.constant 0 : i32
    %c0_i32_0 = arith.constant 0 : i32
    %c0_i32_1 = arith.constant 0 : i32
    return %c0_i32, %c0_i32_0 : i32, i32
  }
  func.func @transform_3(%arg0: i32) -> (i32, i32) {
    %c0_i32 = arith.constant 0 : i32
    %c0_i32_0 = arith.constant 0 : i32
    %c0_i32_1 = arith.constant 0 : i32
    return %c0_i32, %c0_i32_0 : i32, i32
  }
  func.func @transform_4(%arg0: i32) -> (i32, i32) {
    %c0_i32 = arith.constant 0 : i32
    %c0_i32_0 = arith.constant 0 : i32
    %c0_i32_1 = arith.constant 0 : i32
    return %c0_i32, %c0_i32_0 : i32, i32
  }
  func.func @transform_5(%arg0: i32) -> (i32, i32, i32, i32) {
    %c0_i32 = arith.constant 0 : i32
    %c0_i32_0 = arith.constant 0 : i32
    %c0_i32_1 = arith.constant 0 : i32
    %c0_i32_2 = arith.constant 0 : i32
    return %arg0, %c0_i32, %c0_i32_0, %c0_i32_1 : i32, i32, i32, i32
  }
}

</mosaic_0001>

<llo_original>
// kernel: tpu_custom_call.1
$region0: #{tpu_custom_call.1}
  #allocation0 [shape = 'u32[]', space=smem, size = 0x4, offset = 0x4, fixed_abs, tag = 'smem constant byte address 0x4 - core index']
  #allocation1 [shape = 'u32[72,128]{1,0:T(1,128)}', space=vmem, size = 0x9000, scoped, tag = 'internal scratch']
  #allocation2 [shape = 'f32[10,10,4]{2,1,0:T(8,128)}', space=vmem, size = 0x14000, scoped, tag = 'scratch operand']
  #allocation3 [shape = 'f32[10,10,8]{2,1,0:T(8,128)}', space=vmem, size = 0x14000, scoped, tag = 'scratch operand']
  #allocation4 [shape = 'f32[8,8,36]{2,1,0:T(8,128)}', space=vmem, size = 0x8000, scoped, tag = 'scratch operand']
  #allocation5 [shape = 'f32[8,8,72]{2,1,0:T(8,128)}', space=vmem, size = 0x8000, scoped, tag = 'scratch operand']
  %s0 = inlined_call_operand.hbm [shape: f32[2,8,2,8,8], index: 0, kind: input, shape index: {}]
  %s1 = inlined_call_operand.vmem [shape: f32[36,8], index: 1, kind: input, shape index: {}]
  %s2 = inlined_call_operand.vmem [shape: f32[2,8], index: 2, kind: input, shape index: {}]
  %s3 = inlined_call_operand.vmem [shape: f32[72,8], index: 3, kind: input, shape index: {}]
  %s4 = inlined_call_operand.vmem [shape: f32[2,8], index: 4, kind: input, shape index: {}]
  %s5 = inlined_call_operand.hbm [shape: f32[2,8,8,8], index: 5, kind: output, shape index: {}]
  %s6 = sld [smem:[#allocation0]]
  $region57: #{tpu_custom_call.1} parent=0
    _
  %s8 = ssub.s32 1, %s6
  %s9 = scalar_select 0, %s8, %s6
  $region1: #{tpu_custom_call.1} parent=0
    #allocation6 [shape = 'u8[131072]{0}', space=vmem, size = 0x20000, scoped, tag = 'input window, operand 0']
    #allocation7 [shape = 's32[2]{0}', space=sflag, size = 0x8, scoped, tag = 'scoped memory for tpu_custom_call.1']
    #allocation8 [shape = 's32[2]{0}', space=sflag, size = 0x8, scoped, tag = 'scoped memory for tpu_custom_call.1']
    #allocation9 [shape = 'u8[65536]{0}', space=vmem, size = 0x10000, scoped, tag = 'output window, operand 0']
    %10 = vsyncpa [#allocation7], 0
    %s11 = scalar_lea.sflag [#allocation7], 1
    %12 = vsyncpa %s11, 0
    %13 = vsyncpa [#allocation8], 0
    %s14 = scalar_lea.sflag [#allocation8], 1
    %15 = vsyncpa %s14, 0
    loop: start=0, step=1, limit=4
    $region2: #{tpu_custom_call.1} parent=1 // loop_pre_header
      _
    $region3: #{tpu_custom_call.1} parent=1 // loop_header
      %s17 = sphi 0, %s21
      %p18 = scmp.ge.s32.totalorder %s17, 4
      %s27 = sphi 0, %s29
      %s30 = sphi 0, %s27
      %s31 = sphi 0, %s30
      %s47 = sphi 0, %s31
      %s51 = sphi 0, %s51
      %s53 = sphi 0, %s51
      %s54 = sphi 0, %s53
      %s68 = sphi 0, %s54
      %s72 = sphi 0, %s72
      %s74 = sphi 0, %s72
      %s75 = sphi 0, %s74
      %s89 = sphi 0, %s75
      %s93 = sphi 0, %s93
      %s95 = sphi 0, %s93
      %s96 = sphi 0, %s95
      %s110 = sphi 0, %s96
      %s114 = sphi 0, %s114
      %s116 = sphi 0, %s114
      %s117 = sphi 0, %s116
      %s131 = sphi 0, %s117
      %s137 = sphi 0, %s139
      %s140 = sphi 0, %s137
      %s141 = sphi 0, %s140
      %s157 = sphi 0, %s141
    $region4: #{tpu_custom_call.1} parent=1 // loop_header_branch
      %20 = sbr.rel (%p18) target = $region8
    $region5: #{tpu_custom_call.1} parent=1 // loop_body
      %s22 = ssub.s32 %s17, 1
      %s23 = ssub.s32 %s17, 2
      %s24 = sadd.s32 %s17, 1
      %s25 = ssub.s32 %s17, %s24
      %p26 = scmp.eq.s32.totalorder %s25, 0
      %s28 = sadd.s32 %s27, 1
      %s29 = scalar_select %p26, %s27, %s28
      %p32 = pneg %p26
      %p33 = scmp.eq.s32.totalorder %s17, 1
      %p34 = por %p32, %p33
      %p35 = scmp.ne.s32.totalorder %s27, %s30
      %p36 = scmp.eq.s32.totalorder %s17, 0
      %p37 = por %p35, %p36
      %p38 = scmp.ne.s32.totalorder %s27, %s30
      %p39 = scmp.eq.s32.totalorder %s22, 1
      %p40 = por %p38, %p39
      %p41 = scmp.ne.s32.totalorder %s30, %s31
      %p42 = scmp.eq.s32.totalorder %s22, 0
      %p43 = por %p41, %p42
      %p44 = scmp.ne.s32.totalorder %s30, %s31
      %p45 = scmp.eq.s32.totalorder %s23, 1
      %p46 = por %p44, %p45
      %p48 = scmp.ne.s32.totalorder %s31, %s47
      %p49 = scmp.eq.s32.totalorder %s23, 0
      %p50 = por %p48, %p49
      %s52 = sadd.s32 %s51, 1
      %p55 = scmp.eq.s32.totalorder %s17, 1
      %p56 = scmp.ne.s32.totalorder %s51, %s53
      %p57 = scmp.eq.s32.totalorder %s17, 0
      %p58 = por %p56, %p57
      %p59 = scmp.ne.s32.totalorder %s51, %s53
      %p60 = scmp.eq.s32.totalorder %s22, 1
      %p61 = por %p59, %p60
      %p62 = scmp.ne.s32.totalorder %s53, %s54
      %p63 = scmp.eq.s32.totalorder %s22, 0
      %p64 = por %p62, %p63
      %p65 = scmp.ne.s32.totalorder %s53, %s54
      %p66 = scmp.eq.s32.totalorder %s23, 1
      %p67 = por %p65, %p66
      %p69 = scmp.ne.s32.totalorder %s54, %s68
      %p70 = scmp.eq.s32.totalorder %s23, 0
      %p71 = por %p69, %p70
      %s73 = sadd.s32 %s72, 1
      %p76 = scmp.eq.s32.totalorder %s17, 1
      %p77 = scmp.ne.s32.totalorder %s72, %s74
      %p78 = scmp.eq.s32.totalorder %s17, 0
      %p79 = por %p77, %p78
      %p80 = scmp.ne.s32.totalorder %s72, %s74
      %p81 = scmp.eq.s32.totalorder %s22, 1
      %p82 = por %p80, %p81
      %p83 = scmp.ne.s32.totalorder %s74, %s75
      %p84 = scmp.eq.s32.totalorder %s22, 0
      %p85 = por %p83, %p84
      %p86 = scmp.ne.s32.totalorder %s74, %s75
      %p87 = scmp.eq.s32.totalorder %s23, 1
      %p88 = por %p86, %p87
      %p90 = scmp.ne.s32.totalorder %s75, %s89
      %p91 = scmp.eq.s32.totalorder %s23, 0
      %p92 = por %p90, %p91
      %s94 = sadd.s32 %s93, 1
      %p97 = scmp.eq.s32.totalorder %s17, 1
      %p98 = scmp.ne.s32.totalorder %s93, %s95
      %p99 = scmp.eq.s32.totalorder %s17, 0
      %p100 = por %p98, %p99
      %p101 = scmp.ne.s32.totalorder %s93, %s95
      %p102 = scmp.eq.s32.totalorder %s22, 1
      %p103 = por %p101, %p102
      %p104 = scmp.ne.s32.totalorder %s95, %s96
      %p105 = scmp.eq.s32.totalorder %s22, 0
      %p106 = por %p104, %p105
      %p107 = scmp.ne.s32.totalorder %s95, %s96
      %p108 = scmp.eq.s32.totalorder %s23, 1
      %p109 = por %p107, %p108
      %p111 = scmp.ne.s32.totalorder %s96, %s110
      %p112 = scmp.eq.s32.totalorder %s23, 0
      %p113 = por %p111, %p112
      %s115 = sadd.s32 %s114, 1
      %p118 = scmp.eq.s32.totalorder %s17, 1
      %p119 = scmp.ne.s32.totalorder %s114, %s116
      %p120 = scmp.eq.s32.totalorder %s17, 0
      %p121 = por %p119, %p120
      %p122 = scmp.ne.s32.totalorder %s114, %s116
      %p123 = scmp.eq.s32.totalorder %s22, 1
      %p124 = por %p122, %p123
      %p125 = scmp.ne.s32.totalorder %s116, %s117
      %p126 = scmp.eq.s32.totalorder %s22, 0
      %p127 = por %p125, %p126
      %p128 = scmp.ne.s32.totalorder %s116, %s117
      %p129 = scmp.eq.s32.totalorder %s23, 1
      %p130 = por %p128, %p129
      %p132 = scmp.ne.s32.totalorder %s117, %s131
      %p133 = scmp.eq.s32.totalorder %s23, 0
      %p134 = por %p132, %p133
      %s135 = ssub.s32 %s17, %s24
      %p136 = scmp.eq.s32.totalorder %s135, 0
      %s138 = sadd.s32 %s137, 1
      %s139 = scalar_select %p136, %s137, %s138
      %p142 = pneg %p136
      %p143 = scmp.eq.s32.totalorder %s17, 1
      %p144 = por %p142, %p143
      %p145 = scmp.ne.s32.totalorder %s137, %s140
      %p146 = scmp.eq.s32.totalorder %s17, 0
      %p147 = por %p145, %p146
      %p148 = scmp.ne.s32.totalorder %s137, %s140
      %p149 = scmp.eq.s32.totalorder %s22, 1
      %p150 = por %p148, %p149
      %p151 = scmp.ne.s32.totalorder %s140, %s141
      %p152 = scmp.eq.s32.totalorder %s22, 0
      %p153 = por %p151, %p152
      %p154 = scmp.ne.s32.totalorder %s140, %s141
      %p155 = scmp.eq.s32.totalorder %s23, 1
      %p156 = por %p154, %p155
      %p158 = scmp.ne.s32.totalorder %s141, %s157
      %p159 = scmp.eq.s32.totalorder %s23, 0
      %p160 = por %p158, %p159
      %p161 = scmp.le.s32.totalorder 1, %s17
      %p162 = scmp.lt.s32.totalorder %s17, 3
      %p163 = pnand %p161, %p162
      %p164 = pneg %p163
      // Predicated region
      $region9: #{tpu_custom_call.1} parent=5 // pred_check
        _
      $region10: #{tpu_custom_call.1} parent=5 // pred_check_branch
        %166 = sbr.rel (%p163) target = $region12
      $region11: #{tpu_custom_call.1} parent=5 // pred_region
        %s167 = ssub.s32 %s17, 1
        // Predicated region
        $region13: #{tpu_custom_call.1} parent=11 // pred_check
          %p168 = pneg %p64
        $region14: #{tpu_custom_call.1} parent=11 // pred_check_branch
          %170 = sbr.rel (%p168) target = $region16
        $region15: #{tpu_custom_call.1} parent=11 // pred_region
          _
        $region16: #{tpu_custom_call.1} parent=11 // pred_fallthru
          _
        // Predicated region
        $region17: #{tpu_custom_call.1} parent=11 // pred_check
          %p171 = pneg %p85
        $region18: #{tpu_custom_call.1} parent=11 // pred_check_branch
          %173 = sbr.rel (%p171) target = $region20
        $region19: #{tpu_custom_call.1} parent=11 // pred_region
          _
        $region20: #{tpu_custom_call.1} parent=11 // pred_fallthru
          _
        // Predicated region
        $region21: #{tpu_custom_call.1} parent=11 // pred_check
          %p174 = pneg %p106
        $region22: #{tpu_custom_call.1} parent=11 // pred_check_branch
          %176 = sbr.rel (%p174) target = $region24
        $region23: #{tpu_custom_call.1} parent=11 // pred_region
          _
        $region24: #{tpu_custom_call.1} parent=11 // pred_fallthru
          _
        // Predicated region
        $region25: #{tpu_custom_call.1} parent=11 // pred_check
          %p177 = pneg %p127
        $region26: #{tpu_custom_call.1} parent=11 // pred_check_branch
          %179 = sbr.rel (%p177) target = $region28
        $region27: #{tpu_custom_call.1} parent=11 // pred_region
          _
        $region28: #{tpu_custom_call.1} parent=11 // pred_fallthru
          _
      $region12: #{tpu_custom_call.1} parent=5 // pred_fallthru
        _
      %p180 = scmp.lt.s32.totalorder %s17, 2
      // Predicated region
      $region29: #{tpu_custom_call.1} parent=5 // pred_check
        %p181 = pneg %p180
      $region30: #{tpu_custom_call.1} parent=5 // pred_check_branch
        %183 = sbr.rel (%p181) target = $region32
      $region31: #{tpu_custom_call.1} parent=5 // pred_region
        // Predicated region
        $region33: #{tpu_custom_call.1} parent=31 // pred_check
          %p184 = pneg %p37
        $region34: #{tpu_custom_call.1} parent=31 // pred_check_branch
          %186 = sbr.rel (%p184) target = $region36
        $region35: #{tpu_custom_call.1} parent=31 // pred_region
          %s187 = sand.u32 %s27, 1
          %s188 = scalar_lea.sflag [#allocation7], %s187
          %s189 = sand.u32 %s27, 1
          %s190 = smul.addr %s189, 128
          %s191 = scalar_lea.vmem [#allocation6], %s190
          %193 = vsyncadd %s188, 0
          %s194 = smul.addr %s17, 16
          %s195 = smul.addr %s194, 8
          %s196 = scalar_lea.hbm %s0, %s195
          %s197 = sshll.u32 %s196, 4
          %s198 = int_to_ptr.hbm [resolvable:$true] %s197
          %s199 = sshll.u32 %s191, 4
          %s200 = int_to_ptr.vmem [resolvable:$true] %s199
          %205 = dma.hbm_to_vmem [thread:$0]  %s198, 2048, %s200, %s188, 128, 128, 8
        $region36: #{tpu_custom_call.1} parent=31 // pred_fallthru
          _
      $region32: #{tpu_custom_call.1} parent=5 // pred_fallthru
        _
      %p206 = scmp.le.s32.totalorder 1, %s17
      %p207 = scmp.lt.s32.totalorder %s17, 3
      %p208 = pnand %p206, %p207
      %p209 = pneg %p208
      // Predicated region
      $region37: #{tpu_custom_call.1} parent=5 // pred_check
        _
      $region38: #{tpu_custom_call.1} parent=5 // pred_check_branch
        %211 = sbr.rel (%p208) target = $region40
      $region39: #{tpu_custom_call.1} parent=5 // pred_region
        %s212 = ssub.s32 %s17, 1
        %s213 = sand.u32 %s30, 1
        %s214 = scalar_lea.sflag [#allocation7], %s213
        %s215 = sand.u32 %s30, 1
        %s216 = smul.addr %s215, 128
        %s217 = scalar_lea.vmem [#allocation6], %s216
        // Predicated region
        $region41: #{tpu_custom_call.1} parent=39 // pred_check
          %p218 = pneg %p43
        $region42: #{tpu_custom_call.1} parent=39 // pred_check_branch
          %220 = sbr.rel (%p218) target = $region44
        $region43: #{tpu_custom_call.1} parent=39 // pred_region
          %222 = dma.done %s214, 2048
        $region44: #{tpu_custom_call.1} parent=39 // pred_fallthru
          _
        %s223 = sand.u32 %s30, 1
        %s224 = scalar_lea.sflag [#allocation7], %s223
        %s225 = sand.u32 %s30, 1
        %s226 = smul.addr %s225, 128
        %s227 = scalar_lea.vmem [#allocation6], %s226
        %p228 = pneg %p43
        %p229 = pneg %p40
        %p230 = pneg %p64
        %p231 = pneg %p61
        %p232 = pneg %p85
        %p233 = pneg %p82
        %p234 = pneg %p106
        %p235 = pneg %p103
        %p236 = pneg %p127
        %p237 = pneg %p124
        %p238 = pneg %p153
        %p239 = pneg %p150
        %s240 = sand.u32 %s140, 1
        %s241 = scalar_lea.sflag [#allocation8], %s240
        %s242 = sand.u32 %s140, 1
        %s243 = smul.addr %s242, 64
        %s244 = scalar_lea.vmem [#allocation9], %s243
        %vm245 = vcmask 31744
        %246 = vst.msk [vmem:[#allocation2] sm:$0xff] %vm245, 0.0
        %vm247 = vcmask 25600
        %248 = vst.msk [vmem:[#allocation2 + $0x8] sm:$0x3] %vm247, 0.0
        %249 = vst.msk [vmem:[#allocation2 + $0x10] sm:$0xff] %vm245, 0.0
        %250 = vst.msk [vmem:[#allocation2 + $0x18] sm:$0x3] %vm247, 0.0
        %251 = vst.msk [vmem:[#allocation2 + $0x20] sm:$0xff] %vm245, 0.0
        %252 = vst.msk [vmem:[#allocation2 + $0x28] sm:$0x3] %vm247, 0.0
        %253 = vst.msk [vmem:[#allocation2 + $0x30] sm:$0xff] %vm245, 0.0
        %254 = vst.msk [vmem:[#allocation2 + $0x38] sm:$0x3] %vm247, 0.0
        %255 = vst.msk [vmem:[#allocation2 + $0x40] sm:$0xff] %vm245, 0.0
        %256 = vst.msk [vmem:[#allocation2 + $0x48] sm:$0x3] %vm247, 0.0
        %257 = vst.msk [vmem:[#allocation2 + $0x50] sm:$0xff] %vm245, 0.0
        %258 = vst.msk [vmem:[#allocation2 + $0x58] sm:$0x3] %vm247, 0.0
        %259 = vst.msk [vmem:[#allocation2 + $0x60] sm:$0xff] %vm245, 0.0
        %260 = vst.msk [vmem:[#allocation2 + $0x68] sm:$0x3] %vm247, 0.0
        %261 = vst.msk [vmem:[#allocation2 + $0x70] sm:$0xff] %vm245, 0.0
        %262 = vst.msk [vmem:[#allocation2 + $0x78] sm:$0x3] %vm247, 0.0
        %263 = vst.msk [vmem:[#allocation2 + $0x80] sm:$0xff] %vm245, 0.0
        %264 = vst.msk [vmem:[#allocation2 + $0x88] sm:$0x3] %vm247, 0.0
        %265 = vst.msk [vmem:[#allocation2 + $0x90] sm:$0xff] %vm245, 0.0
        %266 = vst.msk [vmem:[#allocation2 + $0x98] sm:$0x3] %vm247, 0.0
        %vm267 = vcmask 64512
        %268 = vst.msk [vmem:[#allocation3] sm:$0xff] %vm267, 0.0
        %vm269 = vcmask 58368
        %270 = vst.msk [vmem:[#allocation3 + $0x8] sm:$0x3] %vm269, 0.0
        %271 = vst.msk [vmem:[#allocation3 + $0x10] sm:$0xff] %vm267, 0.0
        %272 = vst.msk [vmem:[#allocation3 + $0x18] sm:$0x3] %vm269, 0.0
        %273 = vst.msk [vmem:[#allocation3 + $0x20] sm:$0xff] %vm267, 0.0
        %274 = vst.msk [vmem:[#allocation3 + $0x28] sm:$0x3] %vm269, 0.0
        %275 = vst.msk [vmem:[#allocation3 + $0x30] sm:$0xff] %vm267, 0.0
        %276 = vst.msk [vmem:[#allocation3 + $0x38] sm:$0x3] %vm269, 0.0
        %277 = vst.msk [vmem:[#allocation3 + $0x40] sm:$0xff] %vm267, 0.0
        %278 = vst.msk [vmem:[#allocation3 + $0x48] sm:$0x3] %vm269, 0.0
        %279 = vst.msk [vmem:[#allocation3 + $0x50] sm:$0xff] %vm267, 0.0
        %280 = vst.msk [vmem:[#allocation3 + $0x58] sm:$0x3] %vm269, 0.0
        %281 = vst.msk [vmem:[#allocation3 + $0x60] sm:$0xff] %vm267, 0.0
        %282 = vst.msk [vmem:[#allocation3 + $0x68] sm:$0x3] %vm269, 0.0
        %283 = vst.msk [vmem:[#allocation3 + $0x70] sm:$0xff] %vm267, 0.0
        %284 = vst.msk [vmem:[#allocation3 + $0x78] sm:$0x3] %vm269, 0.0
        %285 = vst.msk [vmem:[#allocation3 + $0x80] sm:$0xff] %vm267, 0.0
        %286 = vst.msk [vmem:[#allocation3 + $0x88] sm:$0x3] %vm269, 0.0
        %287 = vst.msk [vmem:[#allocation3 + $0x90] sm:$0xff] %vm267, 0.0
        %288 = vst.msk [vmem:[#allocation3 + $0x98] sm:$0x3] %vm269, 0.0
        %v289 = vld [vmem:[%s217] sm:$0xff]
        %v290 = vld [vmem:[%s217 + $0x10] sm:$0xff]
        %v291 = vld [vmem:[%s217 + $0x20] sm:$0xff]
        %v292 = vld [vmem:[%s217 + $0x30] sm:$0xff]
        %v293 = vld [vmem:[%s217 + $0x40] sm:$0xff]
        %v294 = vld [vmem:[%s217 + $0x50] sm:$0xff]
        %v295 = vld [vmem:[%s217 + $0x60] sm:$0xff]
        %v296 = vld [vmem:[%s217 + $0x70] sm:$0xff]
        %s297 = scalar_lea.vmem %s217, 8 [#allocation6]
        %v298 = vld [vmem:[%s297] sm:$0xff]
        %v299 = vld [vmem:[%s297 + $0x10] sm:$0xff]
        %v300 = vld [vmem:[%s297 + $0x20] sm:$0xff]
        %v301 = vld [vmem:[%s297 + $0x30] sm:$0xff]
        %v302 = vld [vmem:[%s297 + $0x40] sm:$0xff]
        %v303 = vld [vmem:[%s297 + $0x50] sm:$0xff]
        %v304 = vld [vmem:[%s297 + $0x60] sm:$0xff]
        %v305 = vld [vmem:[%s297 + $0x70] sm:$0xff]
        %v306 = vmax.f32 %v289, %v298
        %v307 = vmax.f32 %v290, %v299
        %v308 = vmax.f32 %v291, %v300
        %v309 = vmax.f32 %v292, %v301
        %v310 = vmax.f32 %v293, %v302
        %v311 = vmax.f32 %v294, %v303
        %v312 = vmax.f32 %v295, %v304
        %v313 = vmax.f32 %v296, %v305
        %322 = vrot.lane.b32.xlu0 %v306, 124
        %v323 = vpop.permute.xlu0 %322
        %324 = vrot.lane.b32.xlu0 %v307, 124
        %v325 = vpop.permute.xlu0 %324
        %326 = vrot.lane.b32.xlu0 %v308, 124
        %v327 = vpop.permute.xlu0 %326
        %328 = vrot.lane.b32.xlu0 %v309, 124
        %v329 = vpop.permute.xlu0 %328
        %330 = vrot.lane.b32.xlu0 %v310, 124
        %v331 = vpop.permute.xlu0 %330
        %332 = vrot.lane.b32.xlu0 %v311, 124
        %v333 = vpop.permute.xlu0 %332
        %334 = vrot.lane.b32.xlu0 %v312, 124
        %v335 = vpop.permute.xlu0 %334
        %336 = vrot.lane.b32.xlu0 %v313, 124
        %v337 = vpop.permute.xlu0 %336
        %v346 = vmax.f32 %v306, %v323
        %v347 = vmax.f32 %v307, %v325
        %v348 = vmax.f32 %v308, %v327
        %v349 = vmax.f32 %v309, %v329
        %v350 = vmax.f32 %v310, %v331
        %v351 = vmax.f32 %v311, %v333
        %v352 = vmax.f32 %v312, %v335
        %v353 = vmax.f32 %v313, %v337
        %s354 = scalar_lea.vmem [#allocation2], 16
        %355 = vst.msk [vmem:[%s354 + $0x1] sm:$0xff] %vm245, %v346
        %356 = vst.msk [vmem:[%s354 + $0x11] sm:$0xff] %vm245, %v347
        %357 = vst.msk [vmem:[%s354 + $0x21] sm:$0xff] %vm245, %v348
        %358 = vst.msk [vmem:[%s354 + $0x31] sm:$0xff] %vm245, %v349
        %359 = vst.msk [vmem:[%s354 + $0x41] sm:$0xff] %vm245, %v350
        %360 = vst.msk [vmem:[%s354 + $0x51] sm:$0xff] %vm245, %v351
        %361 = vst.msk [vmem:[%s354 + $0x61] sm:$0xff] %vm245, %v352
        %362 = vst.msk [vmem:[%s354 + $0x71] sm:$0xff] %vm245, %v353
        %v363 = vld [vmem:[#allocation2] sm:$0xff]
        %v364 = vld [vmem:[#allocation2 + $0x10] sm:$0xff]
        %v365 = vld [vmem:[#allocation2 + $0x20] sm:$0xff]
        %v366 = vld [vmem:[#allocation2 + $0x30] sm:$0xff]
        %v367 = vld [vmem:[#allocation2 + $0x40] sm:$0xff]
        %v368 = vld [vmem:[#allocation2 + $0x50] sm:$0xff]
        %v369 = vld [vmem:[#allocation2 + $0x60] sm:$0xff]
        %v370 = vld [vmem:[#allocation2 + $0x70] sm:$0xff]
        %371 = vst.msk [vmem:[#allocation4] sm:$0xff] %vm245, %v363
        %372 = vst.msk [vmem:[#allocation4 + $0x8] sm:$0xff] %vm245, %v364
        %373 = vst.msk [vmem:[#allocation4 + $0x10] sm:$0xff] %vm245, %v365
        %374 = vst.msk [vmem:[#allocation4 + $0x18] sm:$0xff] %vm245, %v366
        %375 = vst.msk [vmem:[#allocation4 + $0x20] sm:$0xff] %vm245, %v367
        %376 = vst.msk [vmem:[#allocation4 + $0x28] sm:$0xff] %vm245, %v368
        %377 = vst.msk [vmem:[#allocation4 + $0x30] sm:$0xff] %vm245, %v369
        %378 = vst.msk [vmem:[#allocation4 + $0x38] sm:$0xff] %vm245, %v370
        %v379 = vld [vmem:[#allocation2 + $0x1] sm:$0xff]
        %v380 = vld [vmem:[#allocation2 + $0x11] sm:$0xff]
        %v381 = vld [vmem:[#allocation2 + $0x21] sm:$0xff]
        %v382 = vld [vmem:[#allocation2 + $0x31] sm:$0xff]
        %v383 = vld [vmem:[#allocation2 + $0x41] sm:$0xff]
        %v384 = vld [vmem:[#allocation2 + $0x51] sm:$0xff]
        %v385 = vld [vmem:[#allocation2 + $0x61] sm:$0xff]
        %v386 = vld [vmem:[#allocation2 + $0x71] sm:$0xff]
        %395 = vrot.lane.b32.xlu0 %v379, 4
        %v396 = vpop.permute.xlu0 %395
        %397 = vrot.lane.b32.xlu0 %v380, 4
        %v398 = vpop.permute.xlu0 %397
        %399 = vrot.lane.b32.xlu0 %v381, 4
        %v400 = vpop.permute.xlu0 %399
        %401 = vrot.lane.b32.xlu0 %v382, 4
        %v402 = vpop.permute.xlu0 %401
        %403 = vrot.lane.b32.xlu0 %v383, 4
        %v404 = vpop.permute.xlu0 %403
        %405 = vrot.lane.b32.xlu0 %v384, 4
        %v406 = vpop.permute.xlu0 %405
        %407 = vrot.lane.b32.xlu0 %v385, 4
        %v408 = vpop.permute.xlu0 %407
        %409 = vrot.lane.b32.xlu0 %v386, 4
        %v410 = vpop.permute.xlu0 %409
        %vm419 = vcmask 64544
        %420 = vst.msk [vmem:[#allocation4] sm:$0xff] %vm419, %v396
        %421 = vst.msk [vmem:[#allocation4 + $0x8] sm:$0xff] %vm419, %v398
        %422 = vst.msk [vmem:[#allocation4 + $0x10] sm:$0xff] %vm419, %v400
        %423 = vst.msk [vmem:[#allocation4 + $0x18] sm:$0xff] %vm419, %v402
        %424 = vst.msk [vmem:[#allocation4 + $0x20] sm:$0xff] %vm419, %v404
        %425 = vst.msk [vmem:[#allocation4 + $0x28] sm:$0xff] %vm419, %v406
        %426 = vst.msk [vmem:[#allocation4 + $0x30] sm:$0xff] %vm419, %v408
        %427 = vst.msk [vmem:[#allocation4 + $0x38] sm:$0xff] %vm419, %v410
        %v428 = vld [vmem:[#allocation2 + $0x2] sm:$0xff]
        %v429 = vld [vmem:[#allocation2 + $0x12] sm:$0xff]
        %v430 = vld [vmem:[#allocation2 + $0x22] sm:$0xff]
        %v431 = vld [vmem:[#allocation2 + $0x32] sm:$0xff]
        %v432 = vld [vmem:[#allocation2 + $0x42] sm:$0xff]
        %v433 = vld [vmem:[#allocation2 + $0x52] sm:$0xff]
        %v434 = vld [vmem:[#allocation2 + $0x62] sm:$0xff]
        %v435 = vld [vmem:[#allocation2 + $0x72] sm:$0xff]
        %444 = vrot.lane.b32.xlu0 %v428, 8
        %v445 = vpop.permute.xlu0 %444
        %446 = vrot.lane.b32.xlu0 %v429, 8
        %v447 = vpop.permute.xlu0 %446
        %448 = vrot.lane.b32.xlu0 %v430, 8
        %v449 = vpop.permute.xlu0 %448
        %450 = vrot.lane.b32.xlu0 %v431, 8
        %v451 = vpop.permute.xlu0 %450
        %452 = vrot.lane.b32.xlu0 %v432, 8
        %v453 = vpop.permute.xlu0 %452
        %454 = vrot.lane.b32.xlu0 %v433, 8
        %v455 = vpop.permute.xlu0 %454
        %456 = vrot.lane.b32.xlu0 %v434, 8
        %v457 = vpop.permute.xlu0 %456
        %458 = vrot.lane.b32.xlu0 %v435, 8
        %v459 = vpop.permute.xlu0 %458
        %vm468 = vcmask 97344
        %469 = vst.msk [vmem:[#allocation4] sm:$0xff] %vm468, %v445
        %470 = vst.msk [vmem:[#allocation4 + $0x8] sm:$0xff] %vm468, %v447
        %471 = vst.msk [vmem:[#allocation4 + $0x10] sm:$0xff] %vm468, %v449
        %472 = vst.msk [vmem:[#allocation4 + $0x18] sm:$0xff] %vm468, %v451
        %473 = vst.msk [vmem:[#allocation4 + $0x20] sm:$0xff] %vm468, %v453
        %474 = vst.msk [vmem:[#allocation4 + $0x28] sm:$0xff] %vm468, %v455
        %475 = vst.msk [vmem:[#allocation4 + $0x30] sm:$0xff] %vm468, %v457
        %476 = vst.msk [vmem:[#allocation4 + $0x38] sm:$0xff] %vm468, %v459
        %v477 = vld [vmem:[%s354] sm:$0xff]
        %v478 = vld [vmem:[%s354 + $0x10] sm:$0xff]
        %v479 = vld [vmem:[%s354 + $0x20] sm:$0xff]
        %v480 = vld [vmem:[%s354 + $0x30] sm:$0xff]
        %v481 = vld [vmem:[%s354 + $0x40] sm:$0xff]
        %v482 = vld [vmem:[%s354 + $0x50] sm:$0xff]
        %v483 = vld [vmem:[%s354 + $0x60] sm:$0xff]
        %v484 = vld [vmem:[%s354 + $0x70] sm:$0xff]
        %493 = vrot.lane.b32.xlu0 %v477, 12
        %v494 = vpop.permute.xlu0 %493
        %495 = vrot.lane.b32.xlu0 %v478, 12
        %v496 = vpop.permute.xlu0 %495
        %497 = vrot.lane.b32.xlu0 %v479, 12
        %v498 = vpop.permute.xlu0 %497
        %499 = vrot.lane.b32.xlu0 %v480, 12
        %v500 = vpop.permute.xlu0 %499
        %501 = vrot.lane.b32.xlu0 %v481, 12
        %v502 = vpop.permute.xlu0 %501
        %503 = vrot.lane.b32.xlu0 %v482, 12
        %v504 = vpop.permute.xlu0 %503
        %505 = vrot.lane.b32.xlu0 %v483, 12
        %v506 = vpop.permute.xlu0 %505
        %507 = vrot.lane.b32.xlu0 %v484, 12
        %v508 = vpop.permute.xlu0 %507
        %vm517 = vcmask 130144
        %518 = vst.msk [vmem:[#allocation4] sm:$0xff] %vm517, %v494
        %519 = vst.msk [vmem:[#allocation4 + $0x8] sm:$0xff] %vm517, %v496
        %520 = vst.msk [vmem:[#allocation4 + $0x10] sm:$0xff] %vm517, %v498
        %521 = vst.msk [vmem:[#allocation4 + $0x18] sm:$0xff] %vm517, %v500
        %522 = vst.msk [vmem:[#allocation4 + $0x20] sm:$0xff] %vm517, %v502
        %523 = vst.msk [vmem:[#allocation4 + $0x28] sm:$0xff] %vm517, %v504
        %524 = vst.msk [vmem:[#allocation4 + $0x30] sm:$0xff] %vm517, %v506
        %525 = vst.msk [vmem:[#allocation4 + $0x38] sm:$0xff] %vm517, %v508
        %v526 = vld [vmem:[%s354 + $0x1] sm:$0xff]
        %v527 = vld [vmem:[%s354 + $0x11] sm:$0xff]
        %v528 = vld [vmem:[%s354 + $0x21] sm:$0xff]
        %v529 = vld [vmem:[%s354 + $0x31] sm:$0xff]
        %v530 = vld [vmem:[%s354 + $0x41] sm:$0xff]
        %v531 = vld [vmem:[%s354 + $0x51] sm:$0xff]
        %v532 = vld [vmem:[%s354 + $0x61] sm:$0xff]
        %v533 = vld [vmem:[%s354 + $0x71] sm:$0xff]
        %542 = vrot.lane.b32.xlu0 %v526, 16
        %v543 = vpop.permute.xlu0 %542
        %544 = vrot.lane.b32.xlu0 %v527, 16
        %v545 = vpop.permute.xlu0 %544
        %546 = vrot.lane.b32.xlu0 %v528, 16
        %v547 = vpop.permute.xlu0 %546
        %548 = vrot.lane.b32.xlu0 %v529, 16
        %v549 = vpop.permute.xlu0 %548
        %550 = vrot.lane.b32.xlu0 %v530, 16
        %v551 = vpop.permute.xlu0 %550
        %552 = vrot.lane.b32.xlu0 %v531, 16
        %v553 = vpop.permute.xlu0 %552
        %554 = vrot.lane.b32.xlu0 %v532, 16
        %v555 = vpop.permute.xlu0 %554
        %556 = vrot.lane.b32.xlu0 %v533, 16
        %v557 = vpop.permute.xlu0 %556
        %vm566 = vcmask 162944
        %567 = vst.msk [vmem:[#allocation4] sm:$0xff] %vm566, %v543
        %568 = vst.msk [vmem:[#allocation4 + $0x8] sm:$0xff] %vm566, %v545
        %569 = vst.msk [vmem:[#allocation4 + $0x10] sm:$0xff] %vm566, %v547
        %570 = vst.msk [vmem:[#allocation4 + $0x18] sm:$0xff] %vm566, %v549
        %571 = vst.msk [vmem:[#allocation4 + $0x20] sm:$0xff] %vm566, %v551
        %572 = vst.msk [vmem:[#allocation4 + $0x28] sm:$0xff] %vm566, %v553
        %573 = vst.msk [vmem:[#allocation4 + $0x30] sm:$0xff] %vm566, %v555
        %574 = vst.msk [vmem:[#allocation4 + $0x38] sm:$0xff] %vm566, %v557
        %v575 = vld [vmem:[%s354 + $0x2] sm:$0xff]
        %v576 = vld [vmem:[%s354 + $0x12] sm:$0xff]
        %v577 = vld [vmem:[%s354 + $0x22] sm:$0xff]
        %v578 = vld [vmem:[%s354 + $0x32] sm:$0xff]
        %v579 = vld [vmem:[%s354 + $0x42] sm:$0xff]
        %v580 = vld [vmem:[%s354 + $0x52] sm:$0xff]
        %v581 = vld [vmem:[%s354 + $0x62] sm:$0xff]
        %v582 = vld [vmem:[%s354 + $0x72] sm:$0xff]
        %591 = vrot.lane.b32.xlu0 %v575, 20
        %v592 = vpop.permute.xlu0 %591
        %593 = vrot.lane.b32.xlu0 %v576, 20
        %v594 = vpop.permute.xlu0 %593
        %595 = vrot.lane.b32.xlu0 %v577, 20
        %v596 = vpop.permute.xlu0 %595
        %597 = vrot.lane.b32.xlu0 %v578, 20
        %v598 = vpop.permute.xlu0 %597
        %599 = vrot.lane.b32.xlu0 %v579, 20
        %v600 = vpop.permute.xlu0 %599
        %601 = vrot.lane.b32.xlu0 %v580, 20
        %v602 = vpop.permute.xlu0 %601
        %603 = vrot.lane.b32.xlu0 %v581, 20
        %v604 = vpop.permute.xlu0 %603
        %605 = vrot.lane.b32.xlu0 %v582, 20
        %v606 = vpop.permute.xlu0 %605
        %vm615 = vcmask 195744
        %616 = vst.msk [vmem:[#allocation4] sm:$0xff] %vm615, %v592
        %617 = vst.msk [vmem:[#allocation4 + $0x8] sm:$0xff] %vm615, %v594
        %618 = vst.msk [vmem:[#allocation4 + $0x10] sm:$0xff] %vm615, %v596
        %619 = vst.msk [vmem:[#allocation4 + $0x18] sm:$0xff] %vm615, %v598
        %620 = vst.msk [vmem:[#allocation4 + $0x20] sm:$0xff] %vm615, %v600
        %621 = vst.msk [vmem:[#allocation4 + $0x28] sm:$0xff] %vm615, %v602
        %622 = vst.msk [vmem:[#allocation4 + $0x30] sm:$0xff] %vm615, %v604
        %623 = vst.msk [vmem:[#allocation4 + $0x38] sm:$0xff] %vm615, %v606
        %s624 = scalar_lea.vmem [#allocation2], 32
        %v625 = vld [vmem:[%s624] sm:$0xff]
        %v626 = vld [vmem:[%s624 + $0x10] sm:$0xff]
        %v627 = vld [vmem:[%s624 + $0x20] sm:$0xff]
        %v628 = vld [vmem:[%s624 + $0x30] sm:$0xff]
        %v629 = vld [vmem:[%s624 + $0x40] sm:$0xff]
        %v630 = vld [vmem:[%s624 + $0x50] sm:$0xff]
        %v631 = vld [vmem:[%s624 + $0x60] sm:$0xff]
        %v632 = vld [vmem:[%s624 + $0x70] sm:$0xff]
        %641 = vrot.lane.b32.xlu0 %v625, 24
        %v642 = vpop.permute.xlu0 %641
        %643 = vrot.lane.b32.xlu0 %v626, 24
        %v644 = vpop.permute.xlu0 %643
        %645 = vrot.lane.b32.xlu0 %v627, 24
        %v646 = vpop.permute.xlu0 %645
        %647 = vrot.lane.b32.xlu0 %v628, 24
        %v648 = vpop.permute.xlu0 %647
        %649 = vrot.lane.b32.xlu0 %v629, 24
        %v650 = vpop.permute.xlu0 %649
        %651 = vrot.lane.b32.xlu0 %v630, 24
        %v652 = vpop.permute.xlu0 %651
        %653 = vrot.lane.b32.xlu0 %v631, 24
        %v654 = vpop.permute.xlu0 %653
        %655 = vrot.lane.b32.xlu0 %v632, 24
        %v656 = vpop.permute.xlu0 %655
        %vm665 = vcmask 228544
        %666 = vst.msk [vmem:[#allocation4] sm:$0xff] %vm665, %v642
        %667 = vst.msk [vmem:[#allocation4 + $0x8] sm:$0xff] %vm665, %v644
        %668 = vst.msk [vmem:[#allocation4 + $0x10] sm:$0xff] %vm665, %v646
        %669 = vst.msk [vmem:[#allocation4 + $0x18] sm:$0xff] %vm665, %v648
        %670 = vst.msk [vmem:[#allocation4 + $0x20] sm:$0xff] %vm665, %v650
        %671 = vst.msk [vmem:[#allocation4 + $0x28] sm:$0xff] %vm665, %v652
        %672 = vst.msk [vmem:[#allocation4 + $0x30] sm:$0xff] %vm665, %v654
        %673 = vst.msk [vmem:[#allocation4 + $0x38] sm:$0xff] %vm665, %v656
        %v674 = vld [vmem:[%s624 + $0x1] sm:$0xff]
        %v675 = vld [vmem:[%s624 + $0x11] sm:$0xff]
        %v676 = vld [vmem:[%s624 + $0x21] sm:$0xff]
        %v677 = vld [vmem:[%s624 + $0x31] sm:$0xff]
        %v678 = vld [vmem:[%s624 + $0x41] sm:$0xff]
        %v679 = vld [vmem:[%s624 + $0x51] sm:$0xff]
        %v680 = vld [vmem:[%s624 + $0x61] sm:$0xff]
        %v681 = vld [vmem:[%s624 + $0x71] sm:$0xff]
        %690 = vrot.lane.b32.xlu0 %v674, 28
        %v691 = vpop.permute.xlu0 %690
        %692 = vrot.lane.b32.xlu0 %v675, 28
        %v693 = vpop.permute.xlu0 %692
        %694 = vrot.lane.b32.xlu0 %v676, 28
        %v695 = vpop.permute.xlu0 %694
        %696 = vrot.lane.b32.xlu0 %v677, 28
        %v697 = vpop.permute.xlu0 %696
        %698 = vrot.lane.b32.xlu0 %v678, 28
        %v699 = vpop.permute.xlu0 %698
        %700 = vrot.lane.b32.xlu0 %v679, 28
        %v701 = vpop.permute.xlu0 %700
        %702 = vrot.lane.b32.xlu0 %v680, 28
        %v703 = vpop.permute.xlu0 %702
        %704 = vrot.lane.b32.xlu0 %v681, 28
        %v705 = vpop.permute.xlu0 %704
        %vm714 = vcmask 261344
        %715 = vst.msk [vmem:[#allocation4] sm:$0xff] %vm714, %v691
        %716 = vst.msk [vmem:[#allocation4 + $0x8] sm:$0xff] %vm714, %v693
        %717 = vst.msk [vmem:[#allocation4 + $0x10] sm:$0xff] %vm714, %v695
        %718 = vst.msk [vmem:[#allocation4 + $0x18] sm:$0xff] %vm714, %v697
        %719 = vst.msk [vmem:[#allocation4 + $0x20] sm:$0xff] %vm714, %v699
        %720 = vst.msk [vmem:[#allocation4 + $0x28] sm:$0xff] %vm714, %v701
        %721 = vst.msk [vmem:[#allocation4 + $0x30] sm:$0xff] %vm714, %v703
        %722 = vst.msk [vmem:[#allocation4 + $0x38] sm:$0xff] %vm714, %v705
        %v723 = vld [vmem:[%s624 + $0x2] sm:$0xff]
        %v724 = vld [vmem:[%s624 + $0x12] sm:$0xff]
        %v725 = vld [vmem:[%s624 + $0x22] sm:$0xff]
        %v726 = vld [vmem:[%s624 + $0x32] sm:$0xff]
        %v727 = vld [vmem:[%s624 + $0x42] sm:$0xff]
        %v728 = vld [vmem:[%s624 + $0x52] sm:$0xff]
        %v729 = vld [vmem:[%s624 + $0x62] sm:$0xff]
        %v730 = vld [vmem:[%s624 + $0x72] sm:$0xff]
        %739 = vrot.lane.b32.xlu0 %v723, 32
        %v740 = vpop.permute.xlu0 %739
        %741 = vrot.lane.b32.xlu0 %v724, 32
        %v742 = vpop.permute.xlu0 %741
        %743 = vrot.lane.b32.xlu0 %v725, 32
        %v744 = vpop.permute.xlu0 %743
        %745 = vrot.lane.b32.xlu0 %v726, 32
        %v746 = vpop.permute.xlu0 %745
        %747 = vrot.lane.b32.xlu0 %v727, 32
        %v748 = vpop.permute.xlu0 %747
        %749 = vrot.lane.b32.xlu0 %v728, 32
        %v750 = vpop.permute.xlu0 %749
        %751 = vrot.lane.b32.xlu0 %v729, 32
        %v752 = vpop.permute.xlu0 %751
        %753 = vrot.lane.b32.xlu0 %v730, 32
        %v754 = vpop.permute.xlu0 %753
        %vm763 = vcmask 294144
        %764 = vst.msk [vmem:[#allocation4] sm:$0xff] %vm763, %v740
        %765 = vst.msk [vmem:[#allocation4 + $0x8] sm:$0xff] %vm763, %v742
        %766 = vst.msk [vmem:[#allocation4 + $0x10] sm:$0xff] %vm763, %v744
        %767 = vst.msk [vmem:[#allocation4 + $0x18] sm:$0xff] %vm763, %v746
        %768 = vst.msk [vmem:[#allocation4 + $0x20] sm:$0xff] %vm763, %v748
        %769 = vst.msk [vmem:[#allocation4 + $0x28] sm:$0xff] %vm763, %v750
        %770 = vst.msk [vmem:[#allocation4 + $0x30] sm:$0xff] %vm763, %v752
        %771 = vst.msk [vmem:[#allocation4 + $0x38] sm:$0xff] %vm763, %v754
        %v772 = vld [vmem:[#allocation4] sm:$0xff]
        %v773 = vld [vmem:[#allocation4 + $0x8] sm:$0xff]
        %v774 = vld [vmem:[#allocation4 + $0x10] sm:$0xff]
        %v775 = vld [vmem:[#allocation4 + $0x18] sm:$0xff]
        %v776 = vld [vmem:[#allocation4 + $0x20] sm:$0xff]
        %v777 = vld [vmem:[#allocation4 + $0x28] sm:$0xff]
        %v778 = vld [vmem:[#allocation4 + $0x30] sm:$0xff]
        %v779 = vld [vmem:[#allocation4 + $0x38] sm:$0xff]
        %v780 = vld [vmem:[%s1] sm:$0xff]
        %v781 = vld [vmem:[%s1 + $0x8] sm:$0xff]
        %v782 = vld [vmem:[%s1 + $0x10] sm:$0xff]
        %v783 = vld [vmem:[%s1 + $0x18] sm:$0xff]
        %v784 = vld [vmem:[%s1 + $0x20] sm:$0xf]
        %v785 = vld [vmem:[%s2] sm:$0x1]
        %v786 = vld [vmem:[%s2 + $0x1] sm:$0x1]
        %v787 = vperm.slane %v785, 0
        %vm788 = vcmask 293888
        %v790 = vsel %vm788, %v772, 0
        %v793 = vsel %vm788, %v773, 0
        %v796 = vsel %vm788, %v774, 0
        %v799 = vsel %vm788, %v775, 0
        %v802 = vsel %vm788, %v776, 0
        %v805 = vsel %vm788, %v777, 0
        %v808 = vsel %vm788, %v778, 0
        %v811 = vsel %vm788, %v779, 0
        %vm813 = vcmask 1043456
        %v815 = vsel %vm813, %v784, 0
        %817 = vmatpush.msra.mxu0 0.0
        %818 = vmatpush.msra.mxu0 0.0
        %819 = vmatpush.msra.mxu0 0.0
        %820 = vmatpush.msra.mxu0 0.0
        %821 = vmatpush.msra.mxu0 0.0
        %822 = vmatpush.msra.mxu0 0.0
        %823 = vmatpush.msra.mxu0 0.0
        %824 = vmatpush.msra.mxu0 0.0
        %825 = vmatpush.msra.mxu0 0.0
        %826 = vmatpush.msra.mxu0 0.0
        %827 = vmatpush.msra.mxu0 0.0
        %828 = vmatpush.msra.mxu0 %v815
        %829 = vmatpush.msra.mxu0 %v783
        %830 = vmatpush.msra.mxu0 %v782
        %831 = vmatpush.msra.mxu0 %v781
        %832 = vmatpush.msra.mxu0 %v780
        %833 = vmatmul.f32.gmra.mxu0 %v790
        %v834 = vpop.f32.mrf.mxu0
        %v835 = vadd.f32 %v787, %v834
        %836 = vmatmul.f32.gmra.mxu0 %v793
        %v837 = vpop.f32.mrf.mxu0
        %v838 = vadd.f32 %v787, %v837
        %839 = vmatmul.f32.gmra.mxu0 %v796
        %v840 = vpop.f32.mrf.mxu0
        %v841 = vadd.f32 %v787, %v840
        %842 = vmatmul.f32.gmra.mxu0 %v799
        %v843 = vpop.f32.mrf.mxu0
        %v844 = vadd.f32 %v787, %v843
        %845 = vmatmul.f32.gmra.mxu0 %v802
        %v846 = vpop.f32.mrf.mxu0
        %v847 = vadd.f32 %v787, %v846
        %848 = vmatmul.f32.gmra.mxu0 %v805
        %v849 = vpop.f32.mrf.mxu0
        %v850 = vadd.f32 %v787, %v849
        %851 = vmatmul.f32.gmra.mxu0 %v808
        %v852 = vpop.f32.mrf.mxu0
        %v853 = vadd.f32 %v787, %v852
        %854 = vmatmul.f32.gmra.mxu0 %v811
        %v855 = vpop.f32.mrf.mxu0
        %v856 = vadd.f32 %v787, %v855
        %857 = vdwg.mxu0
        %vm858 = vcmp.ge.f32.partialorder %v835, 0.0
        %vm859 = vcmp.ge.f32.partialorder %v838, 0.0
        %vm860 = vcmp.ge.f32.partialorder %v841, 0.0
        %vm861 = vcmp.ge.f32.partialorder %v844, 0.0
        %vm862 = vcmp.ge.f32.partialorder %v847, 0.0
        %vm863 = vcmp.ge.f32.partialorder %v850, 0.0
        %vm864 = vcmp.ge.f32.partialorder %v853, 0.0
        %vm865 = vcmp.ge.f32.partialorder %v856, 0.0
        %v866 = vperm.slane %v786, 0
        %v867 = vmul.f32 %v866, %v835
        %v868 = vmul.f32 %v866, %v838
        %v869 = vmul.f32 %v866, %v841
        %v870 = vmul.f32 %v866, %v844
        %v871 = vmul.f32 %v866, %v847
        %v872 = vmul.f32 %v866, %v850
        %v873 = vmul.f32 %v866, %v853
        %v874 = vmul.f32 %v866, %v856
        %v875 = vsel %vm858, %v835, %v867
        %v876 = vsel %vm859, %v838, %v868
        %v877 = vsel %vm860, %v841, %v869
        %v878 = vsel %vm861, %v844, %v870
        %v879 = vsel %vm862, %v847, %v871
        %v880 = vsel %vm863, %v850, %v872
        %v881 = vsel %vm864, %v853, %v873
        %v882 = vsel %vm865, %v856, %v874
        %s883 = scalar_lea.vmem [#allocation3], 16
        %884 = vst.msk [vmem:[%s883 + $0x1] sm:$0xff] %vm267, %v875
        %885 = vst.msk [vmem:[%s883 + $0x11] sm:$0xff] %vm267, %v876
        %886 = vst.msk [vmem:[%s883 + $0x21] sm:$0xff] %vm267, %v877
        %887 = vst.msk [vmem:[%s883 + $0x31] sm:$0xff] %vm267, %v878
        %888 = vst.msk [vmem:[%s883 + $0x41] sm:$0xff] %vm267, %v879
        %889 = vst.msk [vmem:[%s883 + $0x51] sm:$0xff] %vm267, %v880
        %890 = vst.msk [vmem:[%s883 + $0x61] sm:$0xff] %vm267, %v881
        %891 = vst.msk [vmem:[%s883 + $0x71] sm:$0xff] %vm267, %v882
        %v892 = vld [vmem:[#allocation3] sm:$0xff]
        %v893 = vld [vmem:[#allocation3 + $0x10] sm:$0xff]
        %v894 = vld [vmem:[#allocation3 + $0x20] sm:$0xff]
        %v895 = vld [vmem:[#allocation3 + $0x30] sm:$0xff]
        %v896 = vld [vmem:[#allocation3 + $0x40] sm:$0xff]
        %v897 = vld [vmem:[#allocation3 + $0x50] sm:$0xff]
        %v898 = vld [vmem:[#allocation3 + $0x60] sm:$0xff]
        %v899 = vld [vmem:[#allocation3 + $0x70] sm:$0xff]
        %900 = vst.msk [vmem:[#allocation5] sm:$0xff] %vm267, %v892
        %901 = vst.msk [vmem:[#allocation5 + $0x8] sm:$0xff] %vm267, %v893
        %902 = vst.msk [vmem:[#allocation5 + $0x10] sm:$0xff] %vm267, %v894
        %903 = vst.msk [vmem:[#allocation5 + $0x18] sm:$0xff] %vm267, %v895
        %904 = vst.msk [vmem:[#allocation5 + $0x20] sm:$0xff] %vm267, %v896
        %905 = vst.msk [vmem:[#allocation5 + $0x28] sm:$0xff] %vm267, %v897
        %906 = vst.msk [vmem:[#allocation5 + $0x30] sm:$0xff] %vm267, %v898
        %907 = vst.msk [vmem:[#allocation5 + $0x38] sm:$0xff] %vm267, %v899
        %v908 = vld [vmem:[#allocation3 + $0x1] sm:$0xff]
        %v909 = vld [vmem:[#allocation3 + $0x11] sm:$0xff]
        %v910 = vld [vmem:[#allocation3 + $0x21] sm:$0xff]
        %v911 = vld [vmem:[#allocation3 + $0x31] sm:$0xff]
        %v912 = vld [vmem:[#allocation3 + $0x41] sm:$0xff]
        %v913 = vld [vmem:[#allocation3 + $0x51] sm:$0xff]
        %v914 = vld [vmem:[#allocation3 + $0x61] sm:$0xff]
        %v915 = vld [vmem:[#allocation3 + $0x71] sm:$0xff]
        %924 = vrot.lane.b32.xlu0 %v908, 8
        %v925 = vpop.permute.xlu0 %924
        %926 = vrot.lane.b32.xlu0 %v909, 8
        %v927 = vpop.permute.xlu0 %926
        %928 = vrot.lane.b32.xlu0 %v910, 8
        %v929 = vpop.permute.xlu0 %928
        %930 = vrot.lane.b32.xlu0 %v911, 8
        %v931 = vpop.permute.xlu0 %930
        %932 = vrot.lane.b32.xlu0 %v912, 8
        %v933 = vpop.permute.xlu0 %932
        %934 = vrot.lane.b32.xlu0 %v913, 8
        %v935 = vpop.permute.xlu0 %934
        %936 = vrot.lane.b32.xlu0 %v914, 8
        %v937 = vpop.permute.xlu0 %936
        %938 = vrot.lane.b32.xlu0 %v915, 8
        %v939 = vpop.permute.xlu0 %938
        %vm948 = vcmask 130112
        %949 = vst.msk [vmem:[#allocation5] sm:$0xff] %vm948, %v925
        %950 = vst.msk [vmem:[#allocation5 + $0x8] sm:$0xff] %vm948, %v927
        %951 = vst.msk [vmem:[#allocation5 + $0x10] sm:$0xff] %vm948, %v929
        %952 = vst.msk [vmem:[#allocation5 + $0x18] sm:$0xff] %vm948, %v931
        %953 = vst.msk [vmem:[#allocation5 + $0x20] sm:$0xff] %vm948, %v933
        %954 = vst.msk [vmem:[#allocation5 + $0x28] sm:$0xff] %vm948, %v935
        %955 = vst.msk [vmem:[#allocation5 + $0x30] sm:$0xff] %vm948, %v937
        %956 = vst.msk [vmem:[#allocation5 + $0x38] sm:$0xff] %vm948, %v939
        %v957 = vld [vmem:[#allocation3 + $0x2] sm:$0xff]
        %v958 = vld [vmem:[#allocation3 + $0x12] sm:$0xff]
        %v959 = vld [vmem:[#allocation3 + $0x22] sm:$0xff]
        %v960 = vld [vmem:[#allocation3 + $0x32] sm:$0xff]
        %v961 = vld [vmem:[#allocation3 + $0x42] sm:$0xff]
        %v962 = vld [vmem:[#allocation3 + $0x52] sm:$0xff]
        %v963 = vld [vmem:[#allocation3 + $0x62] sm:$0xff]
        %v964 = vld [vmem:[#allocation3 + $0x72] sm:$0xff]
        %973 = vrot.lane.b32.xlu0 %v957, 16
        %v974 = vpop.permute.xlu0 %973
        %975 = vrot.lane.b32.xlu0 %v958, 16
        %v976 = vpop.permute.xlu0 %975
        %977 = vrot.lane.b32.xlu0 %v959, 16
        %v978 = vpop.permute.xlu0 %977
        %979 = vrot.lane.b32.xlu0 %v960, 16
        %v980 = vpop.permute.xlu0 %979
        %981 = vrot.lane.b32.xlu0 %v961, 16
        %v982 = vpop.permute.xlu0 %981
        %983 = vrot.lane.b32.xlu0 %v962, 16
        %v984 = vpop.permute.xlu0 %983
        %985 = vrot.lane.b32.xlu0 %v963, 16
        %v986 = vpop.permute.xlu0 %985
        %987 = vrot.lane.b32.xlu0 %v964, 16
        %v988 = vpop.permute.xlu0 %987
        %vm997 = vcmask 195712
        %998 = vst.msk [vmem:[#allocation5] sm:$0xff] %vm997, %v974
        %999 = vst.msk [vmem:[#allocation5 + $0x8] sm:$0xff] %vm997, %v976
        %1000 = vst.msk [vmem:[#allocation5 + $0x10] sm:$0xff] %vm997, %v978
        %1001 = vst.msk [vmem:[#allocation5 + $0x18] sm:$0xff] %vm997, %v980
        %1002 = vst.msk [vmem:[#allocation5 + $0x20] sm:$0xff] %vm997, %v982
        %1003 = vst.msk [vmem:[#allocation5 + $0x28] sm:$0xff] %vm997, %v984
        %1004 = vst.msk [vmem:[#allocation5 + $0x30] sm:$0xff] %vm997, %v986
        %1005 = vst.msk [vmem:[#allocation5 + $0x38] sm:$0xff] %vm997, %v988
        %v1006 = vld [vmem:[%s883] sm:$0xff]
        %v1007 = vld [vmem:[%s883 + $0x10] sm:$0xff]
        %v1008 = vld [vmem:[%s883 + $0x20] sm:$0xff]
        %v1009 = vld [vmem:[%s883 + $0x30] sm:$0xff]
        %v1010 = vld [vmem:[%s883 + $0x40] sm:$0xff]
        %v1011 = vld [vmem:[%s883 + $0x50] sm:$0xff]
        %v1012 = vld [vmem:[%s883 + $0x60] sm:$0xff]
        %v1013 = vld [vmem:[%s883 + $0x70] sm:$0xff]
        %1022 = vrot.lane.b32.xlu0 %v1006, 24
        %v1023 = vpop.permute.xlu0 %1022
        %1024 = vrot.lane.b32.xlu0 %v1007, 24
        %v1025 = vpop.permute.xlu0 %1024
        %1026 = vrot.lane.b32.xlu0 %v1008, 24
        %v1027 = vpop.permute.xlu0 %1026
        %1028 = vrot.lane.b32.xlu0 %v1009, 24
        %v1029 = vpop.permute.xlu0 %1028
        %1030 = vrot.lane.b32.xlu0 %v1010, 24
        %v1031 = vpop.permute.xlu0 %1030
        %1032 = vrot.lane.b32.xlu0 %v1011, 24
        %v1033 = vpop.permute.xlu0 %1032
        %1034 = vrot.lane.b32.xlu0 %v1012, 24
        %v1035 = vpop.permute.xlu0 %1034
        %1036 = vrot.lane.b32.xlu0 %v1013, 24
        %v1037 = vpop.permute.xlu0 %1036
        %vm1046 = vcmask 261312
        %1047 = vst.msk [vmem:[#allocation5] sm:$0xff] %vm1046, %v1023
        %1048 = vst.msk [vmem:[#allocation5 + $0x8] sm:$0xff] %vm1046, %v1025
        %1049 = vst.msk [vmem:[#allocation5 + $0x10] sm:$0xff] %vm1046, %v1027
        %1050 = vst.msk [vmem:[#allocation5 + $0x18] sm:$0xff] %vm1046, %v1029
        %1051 = vst.msk [vmem:[#allocation5 + $0x20] sm:$0xff] %vm1046, %v1031
        %1052 = vst.msk [vmem:[#allocation5 + $0x28] sm:$0xff] %vm1046, %v1033
        %1053 = vst.msk [vmem:[#allocation5 + $0x30] sm:$0xff] %vm1046, %v1035
        %1054 = vst.msk [vmem:[#allocation5 + $0x38] sm:$0xff] %vm1046, %v1037
        %v1055 = vld [vmem:[%s883 + $0x1] sm:$0xff]
        %v1056 = vld [vmem:[%s883 + $0x11] sm:$0xff]
        %v1057 = vld [vmem:[%s883 + $0x21] sm:$0xff]
        %v1058 = vld [vmem:[%s883 + $0x31] sm:$0xff]
        %v1059 = vld [vmem:[%s883 + $0x41] sm:$0xff]
        %v1060 = vld [vmem:[%s883 + $0x51] sm:$0xff]
        %v1061 = vld [vmem:[%s883 + $0x61] sm:$0xff]
        %v1062 = vld [vmem:[%s883 + $0x71] sm:$0xff]
        %1071 = vrot.lane.b32.xlu0 %v1055, 32
        %v1072 = vpop.permute.xlu0 %1071
        %1073 = vrot.lane.b32.xlu0 %v1056, 32
        %v1074 = vpop.permute.xlu0 %1073
        %1075 = vrot.lane.b32.xlu0 %v1057, 32
        %v1076 = vpop.permute.xlu0 %1075
        %1077 = vrot.lane.b32.xlu0 %v1058, 32
        %v1078 = vpop.permute.xlu0 %1077
        %1079 = vrot.lane.b32.xlu0 %v1059, 32
        %v1080 = vpop.permute.xlu0 %1079
        %1081 = vrot.lane.b32.xlu0 %v1060, 32
        %v1082 = vpop.permute.xlu0 %1081
        %1083 = vrot.lane.b32.xlu0 %v1061, 32
        %v1084 = vpop.permute.xlu0 %1083
        %1085 = vrot.lane.b32.xlu0 %v1062, 32
        %v1086 = vpop.permute.xlu0 %1085
        %vm1095 = vcmask 326912
        %1096 = vst.msk [vmem:[#allocation5] sm:$0xff] %vm1095, %v1072
        %1097 = vst.msk [vmem:[#allocation5 + $0x8] sm:$0xff] %vm1095, %v1074
        %1098 = vst.msk [vmem:[#allocation5 + $0x10] sm:$0xff] %vm1095, %v1076
        %1099 = vst.msk [vmem:[#allocation5 + $0x18] sm:$0xff] %vm1095, %v1078
        %1100 = vst.msk [vmem:[#allocation5 + $0x20] sm:$0xff] %vm1095, %v1080
        %1101 = vst.msk [vmem:[#allocation5 + $0x28] sm:$0xff] %vm1095, %v1082
        %1102 = vst.msk [vmem:[#allocation5 + $0x30] sm:$0xff] %vm1095, %v1084
        %1103 = vst.msk [vmem:[#allocation5 + $0x38] sm:$0xff] %vm1095, %v1086
        %v1104 = vld [vmem:[%s883 + $0x2] sm:$0xff]
        %v1105 = vld [vmem:[%s883 + $0x12] sm:$0xff]
        %v1106 = vld [vmem:[%s883 + $0x22] sm:$0xff]
        %v1107 = vld [vmem:[%s883 + $0x32] sm:$0xff]
        %v1108 = vld [vmem:[%s883 + $0x42] sm:$0xff]
        %v1109 = vld [vmem:[%s883 + $0x52] sm:$0xff]
        %v1110 = vld [vmem:[%s883 + $0x62] sm:$0xff]
        %v1111 = vld [vmem:[%s883 + $0x72] sm:$0xff]
        %1120 = vrot.lane.b32.xlu0 %v1104, 40
        %v1121 = vpop.permute.xlu0 %1120
        %1122 = vrot.lane.b32.xlu0 %v1105, 40
        %v1123 = vpop.permute.xlu0 %1122
        %1124 = vrot.lane.b32.xlu0 %v1106, 40
        %v1125 = vpop.permute.xlu0 %1124
        %1126 = vrot.lane.b32.xlu0 %v1107, 40
        %v1127 = vpop.permute.xlu0 %1126
        %1128 = vrot.lane.b32.xlu0 %v1108, 40
        %v1129 = vpop.permute.xlu0 %1128
        %1130 = vrot.lane.b32.xlu0 %v1109, 40
        %v1131 = vpop.permute.xlu0 %1130
        %1132 = vrot.lane.b32.xlu0 %v1110, 40
        %v1133 = vpop.permute.xlu0 %1132
        %1134 = vrot.lane.b32.xlu0 %v1111, 40
        %v1135 = vpop.permute.xlu0 %1134
        %vm1144 = vcmask 392512
        %1145 = vst.msk [vmem:[#allocation5] sm:$0xff] %vm1144, %v1121
        %1146 = vst.msk [vmem:[#allocation5 + $0x8] sm:$0xff] %vm1144, %v1123
        %1147 = vst.msk [vmem:[#allocation5 + $0x10] sm:$0xff] %vm1144, %v1125
        %1148 = vst.msk [vmem:[#allocation5 + $0x18] sm:$0xff] %vm1144, %v1127
        %1149 = vst.msk [vmem:[#allocation5 + $0x20] sm:$0xff] %vm1144, %v1129
        %1150 = vst.msk [vmem:[#allocation5 + $0x28] sm:$0xff] %vm1144, %v1131
        %1151 = vst.msk [vmem:[#allocation5 + $0x30] sm:$0xff] %vm1144, %v1133
        %1152 = vst.msk [vmem:[#allocation5 + $0x38] sm:$0xff] %vm1144, %v1135
        %s1153 = scalar_lea.vmem [#allocation3], 32
        %v1154 = vld [vmem:[%s1153] sm:$0xff]
        %v1155 = vld [vmem:[%s1153 + $0x10] sm:$0xff]
        %v1156 = vld [vmem:[%s1153 + $0x20] sm:$0xff]
        %v1157 = vld [vmem:[%s1153 + $0x30] sm:$0xff]
        %v1158 = vld [vmem:[%s1153 + $0x40] sm:$0xff]
        %v1159 = vld [vmem:[%s1153 + $0x50] sm:$0xff]
        %v1160 = vld [vmem:[%s1153 + $0x60] sm:$0xff]
        %v1161 = vld [vmem:[%s1153 + $0x70] sm:$0xff]
        %1170 = vrot.lane.b32.xlu0 %v1154, 48
        %v1171 = vpop.permute.xlu0 %1170
        %1172 = vrot.lane.b32.xlu0 %v1155, 48
        %v1173 = vpop.permute.xlu0 %1172
        %1174 = vrot.lane.b32.xlu0 %v1156, 48
        %v1175 = vpop.permute.xlu0 %1174
        %1176 = vrot.lane.b32.xlu0 %v1157, 48
        %v1177 = vpop.permute.xlu0 %1176
        %1178 = vrot.lane.b32.xlu0 %v1158, 48
        %v1179 = vpop.permute.xlu0 %1178
        %1180 = vrot.lane.b32.xlu0 %v1159, 48
        %v1181 = vpop.permute.xlu0 %1180
        %1182 = vrot.lane.b32.xlu0 %v1160, 48
        %v1183 = vpop.permute.xlu0 %1182
        %1184 = vrot.lane.b32.xlu0 %v1161, 48
        %v1185 = vpop.permute.xlu0 %1184
        %vm1194 = vcmask 458112
        %1195 = vst.msk [vmem:[#allocation5] sm:$0xff] %vm1194, %v1171
        %1196 = vst.msk [vmem:[#allocation5 + $0x8] sm:$0xff] %vm1194, %v1173
        %1197 = vst.msk [vmem:[#allocation5 + $0x10] sm:$0xff] %vm1194, %v1175
        %1198 = vst.msk [vmem:[#allocation5 + $0x18] sm:$0xff] %vm1194, %v1177
        %1199 = vst.msk [vmem:[#allocation5 + $0x20] sm:$0xff] %vm1194, %v1179
        %1200 = vst.msk [vmem:[#allocation5 + $0x28] sm:$0xff] %vm1194, %v1181
        %1201 = vst.msk [vmem:[#allocation5 + $0x30] sm:$0xff] %vm1194, %v1183
        %1202 = vst.msk [vmem:[#allocation5 + $0x38] sm:$0xff] %vm1194, %v1185
        %v1203 = vld [vmem:[%s1153 + $0x1] sm:$0xff]
        %v1204 = vld [vmem:[%s1153 + $0x11] sm:$0xff]
        %v1205 = vld [vmem:[%s1153 + $0x21] sm:$0xff]
        %v1206 = vld [vmem:[%s1153 + $0x31] sm:$0xff]
        %v1207 = vld [vmem:[%s1153 + $0x41] sm:$0xff]
        %v1208 = vld [vmem:[%s1153 + $0x51] sm:$0xff]
        %v1209 = vld [vmem:[%s1153 + $0x61] sm:$0xff]
        %v1210 = vld [vmem:[%s1153 + $0x71] sm:$0xff]
        %1219 = vrot.lane.b32.xlu0 %v1203, 56
        %v1220 = vpop.permute.xlu0 %1219
        %1221 = vrot.lane.b32.xlu0 %v1204, 56
        %v1222 = vpop.permute.xlu0 %1221
        %1223 = vrot.lane.b32.xlu0 %v1205, 56
        %v1224 = vpop.permute.xlu0 %1223
        %1225 = vrot.lane.b32.xlu0 %v1206, 56
        %v1226 = vpop.permute.xlu0 %1225
        %1227 = vrot.lane.b32.xlu0 %v1207, 56
        %v1228 = vpop.permute.xlu0 %1227
        %1229 = vrot.lane.b32.xlu0 %v1208, 56
        %v1230 = vpop.permute.xlu0 %1229
        %1231 = vrot.lane.b32.xlu0 %v1209, 56
        %v1232 = vpop.permute.xlu0 %1231
        %1233 = vrot.lane.b32.xlu0 %v1210, 56
        %v1234 = vpop.permute.xlu0 %1233
        %vm1243 = vcmask 523712
        %1244 = vst.msk [vmem:[#allocation5] sm:$0xff] %vm1243, %v1220
        %1245 = vst.msk [vmem:[#allocation5 + $0x8] sm:$0xff] %vm1243, %v1222
        %1246 = vst.msk [vmem:[#allocation5 + $0x10] sm:$0xff] %vm1243, %v1224
        %1247 = vst.msk [vmem:[#allocation5 + $0x18] sm:$0xff] %vm1243, %v1226
        %1248 = vst.msk [vmem:[#allocation5 + $0x20] sm:$0xff] %vm1243, %v1228
        %1249 = vst.msk [vmem:[#allocation5 + $0x28] sm:$0xff] %vm1243, %v1230
        %1250 = vst.msk [vmem:[#allocation5 + $0x30] sm:$0xff] %vm1243, %v1232
        %1251 = vst.msk [vmem:[#allocation5 + $0x38] sm:$0xff] %vm1243, %v1234
        %v1252 = vld [vmem:[%s1153 + $0x2] sm:$0xff]
        %v1253 = vld [vmem:[%s1153 + $0x12] sm:$0xff]
        %v1254 = vld [vmem:[%s1153 + $0x22] sm:$0xff]
        %v1255 = vld [vmem:[%s1153 + $0x32] sm:$0xff]
        %v1256 = vld [vmem:[%s1153 + $0x42] sm:$0xff]
        %v1257 = vld [vmem:[%s1153 + $0x52] sm:$0xff]
        %v1258 = vld [vmem:[%s1153 + $0x62] sm:$0xff]
        %v1259 = vld [vmem:[%s1153 + $0x72] sm:$0xff]
        %1268 = vrot.lane.b32.xlu0 %v1252, 64
        %v1269 = vpop.permute.xlu0 %1268
        %1270 = vrot.lane.b32.xlu0 %v1253, 64
        %v1271 = vpop.permute.xlu0 %1270
        %1272 = vrot.lane.b32.xlu0 %v1254, 64
        %v1273 = vpop.permute.xlu0 %1272
        %1274 = vrot.lane.b32.xlu0 %v1255, 64
        %v1275 = vpop.permute.xlu0 %1274
        %1276 = vrot.lane.b32.xlu0 %v1256, 64
        %v1277 = vpop.permute.xlu0 %1276
        %1278 = vrot.lane.b32.xlu0 %v1257, 64
        %v1279 = vpop.permute.xlu0 %1278
        %1280 = vrot.lane.b32.xlu0 %v1258, 64
        %v1281 = vpop.permute.xlu0 %1280
        %1282 = vrot.lane.b32.xlu0 %v1259, 64
        %v1283 = vpop.permute.xlu0 %1282
        %vm1292 = vcmask 589312
        %1293 = vst.msk [vmem:[#allocation5] sm:$0xff] %vm1292, %v1269
        %1294 = vst.msk [vmem:[#allocation5 + $0x8] sm:$0xff] %vm1292, %v1271
        %1295 = vst.msk [vmem:[#allocation5 + $0x10] sm:$0xff] %vm1292, %v1273
        %1296 = vst.msk [vmem:[#allocation5 + $0x18] sm:$0xff] %vm1292, %v1275
        %1297 = vst.msk [vmem:[#allocation5 + $0x20] sm:$0xff] %vm1292, %v1277
        %1298 = vst.msk [vmem:[#allocation5 + $0x28] sm:$0xff] %vm1292, %v1279
        %1299 = vst.msk [vmem:[#allocation5 + $0x30] sm:$0xff] %vm1292, %v1281
        %1300 = vst.msk [vmem:[#allocation5 + $0x38] sm:$0xff] %vm1292, %v1283
        %v1301 = vld [vmem:[#allocation5] sm:$0xff]
        %v1302 = vld [vmem:[#allocation5 + $0x8] sm:$0xff]
        %v1303 = vld [vmem:[#allocation5 + $0x10] sm:$0xff]
        %v1304 = vld [vmem:[#allocation5 + $0x18] sm:$0xff]
        %v1305 = vld [vmem:[#allocation5 + $0x20] sm:$0xff]
        %v1306 = vld [vmem:[#allocation5 + $0x28] sm:$0xff]
        %v1307 = vld [vmem:[#allocation5 + $0x30] sm:$0xff]
        %v1308 = vld [vmem:[#allocation5 + $0x38] sm:$0xff]
        %v1309 = vld [vmem:[%s3] sm:$0xff]
        %v1310 = vld [vmem:[%s3 + $0x8] sm:$0xff]
        %v1311 = vld [vmem:[%s3 + $0x10] sm:$0xff]
        %v1312 = vld [vmem:[%s3 + $0x18] sm:$0xff]
        %v1313 = vld [vmem:[%s3 + $0x20] sm:$0xff]
        %v1314 = vld [vmem:[%s3 + $0x28] sm:$0xff]
        %v1315 = vld [vmem:[%s3 + $0x30] sm:$0xff]
        %v1316 = vld [vmem:[%s3 + $0x38] sm:$0xff]
        %v1317 = vld [vmem:[%s3 + $0x40] sm:$0xff]
        %v1318 = vld [vmem:[%s4] sm:$0x1]
        %v1319 = vld [vmem:[%s4 + $0x1] sm:$0x1]
        %v1320 = vperm.slane %v1318, 0
        %vm1321 = vcmask 588800
        %v1323 = vsel %vm1321, %v1301, 0
        %v1326 = vsel %vm1321, %v1302, 0
        %v1329 = vsel %vm1321, %v1303, 0
        %v1332 = vsel %vm1321, %v1304, 0
        %v1335 = vsel %vm1321, %v1305, 0
        %v1338 = vsel %vm1321, %v1306, 0
        %v1341 = vsel %vm1321, %v1307, 0
        %v1344 = vsel %vm1321, %v1308, 0
        %1346 = vmatpush.msra.mxu0 0.0
        %1347 = vmatpush.msra.mxu0 0.0
        %1348 = vmatpush.msra.mxu0 0.0
        %1349 = vmatpush.msra.mxu0 0.0
        %1350 = vmatpush.msra.mxu0 0.0
        %1351 = vmatpush.msra.mxu0 0.0
        %1352 = vmatpush.msra.mxu0 0.0
        %1353 = vmatpush.msra.mxu0 %v1317
        %1354 = vmatpush.msra.mxu0 %v1316
        %1355 = vmatpush.msra.mxu0 %v1315
        %1356 = vmatpush.msra.mxu0 %v1314
        %1357 = vmatpush.msra.mxu0 %v1313
        %1358 = vmatpush.msra.mxu0 %v1312
        %1359 = vmatpush.msra.mxu0 %v1311
        %1360 = vmatpush.msra.mxu0 %v1310
        %1361 = vmatpush.msra.mxu0 %v1309
        %1362 = vmatmul.f32.gmra.mxu0 %v1323
        %v1363 = vpop.f32.mrf.mxu0
        %v1364 = vadd.f32 %v1320, %v1363
        %1365 = vmatmul.f32.gmra.mxu0 %v1326
        %v1366 = vpop.f32.mrf.mxu0
        %v1367 = vadd.f32 %v1320, %v1366
        %1368 = vmatmul.f32.gmra.mxu0 %v1329
        %v1369 = vpop.f32.mrf.mxu0
        %v1370 = vadd.f32 %v1320, %v1369
        %1371 = vmatmul.f32.gmra.mxu0 %v1332
        %v1372 = vpop.f32.mrf.mxu0
        %v1373 = vadd.f32 %v1320, %v1372
        %1374 = vmatmul.f32.gmra.mxu0 %v1335
        %v1375 = vpop.f32.mrf.mxu0
        %v1376 = vadd.f32 %v1320, %v1375
        %1377 = vmatmul.f32.gmra.mxu0 %v1338
        %v1378 = vpop.f32.mrf.mxu0
        %v1379 = vadd.f32 %v1320, %v1378
        %1380 = vmatmul.f32.gmra.mxu0 %v1341
        %v1381 = vpop.f32.mrf.mxu0
        %v1382 = vadd.f32 %v1320, %v1381
        %1383 = vmatmul.f32.gmra.mxu0 %v1344
        %v1384 = vpop.f32.mrf.mxu0
        %v1385 = vadd.f32 %v1320, %v1384
        %1386 = vdwg.mxu0
        %vm1387 = vcmp.ge.f32.partialorder %v1364, 0.0
        %vm1388 = vcmp.ge.f32.partialorder %v1367, 0.0
        %vm1389 = vcmp.ge.f32.partialorder %v1370, 0.0
        %vm1390 = vcmp.ge.f32.partialorder %v1373, 0.0
        %vm1391 = vcmp.ge.f32.partialorder %v1376, 0.0
        %vm1392 = vcmp.ge.f32.partialorder %v1379, 0.0
        %vm1393 = vcmp.ge.f32.partialorder %v1382, 0.0
        %vm1394 = vcmp.ge.f32.partialorder %v1385, 0.0
        %v1395 = vperm.slane %v1319, 0
        %v1396 = vmul.f32 %v1395, %v1364
        %v1397 = vmul.f32 %v1395, %v1367
        %v1398 = vmul.f32 %v1395, %v1370
        %v1399 = vmul.f32 %v1395, %v1373
        %v1400 = vmul.f32 %v1395, %v1376
        %v1401 = vmul.f32 %v1395, %v1379
        %v1402 = vmul.f32 %v1395, %v1382
        %v1403 = vmul.f32 %v1395, %v1385
        %v1404 = vsel %vm1387, %v1364, %v1396
        %v1405 = vsel %vm1388, %v1367, %v1397
        %v1406 = vsel %vm1389, %v1370, %v1398
        %v1407 = vsel %vm1390, %v1373, %v1399
        %v1408 = vsel %vm1391, %v1376, %v1400
        %v1409 = vsel %vm1392, %v1379, %v1401
        %v1410 = vsel %vm1393, %v1382, %v1402
        %v1411 = vsel %vm1394, %v1385, %v1403
        %1412 = vst.msk [vmem:[%s244] sm:$0xff] %vm267, %v1404
        %1413 = vst.msk [vmem:[%s244 + $0x8] sm:$0xff] %vm267, %v1405
        %1414 = vst.msk [vmem:[%s244 + $0x10] sm:$0xff] %vm267, %v1406
        %1415 = vst.msk [vmem:[%s244 + $0x18] sm:$0xff] %vm267, %v1407
        %1416 = vst.msk [vmem:[%s244 + $0x20] sm:$0xff] %vm267, %v1408
        %1417 = vst.msk [vmem:[%s244 + $0x28] sm:$0xff] %vm267, %v1409
        %1418 = vst.msk [vmem:[%s244 + $0x30] sm:$0xff] %vm267, %v1410
        %1419 = vst.msk [vmem:[%s244 + $0x38] sm:$0xff] %vm267, %v1411
        %s1420 = sand.u32 %s140, 1
        %s1421 = scalar_lea.sflag [#allocation8], %s1420
        %s1422 = sand.u32 %s140, 1
        %s1423 = smul.addr %s1422, 64
        %s1424 = scalar_lea.vmem [#allocation9], %s1423
        // Predicated region
        $region45: #{tpu_custom_call.1} parent=39 // pred_check
          %p1425 = pneg %p150
        $region46: #{tpu_custom_call.1} parent=39 // pred_check_branch
          %1427 = sbr.rel (%p1425) target = $region48
        $region47: #{tpu_custom_call.1} parent=39 // pred_region
          %1429 = vsyncadd %s1421, 0
          %s1430 = smul.addr %s22, 8
          %s1431 = smul.addr %s1430, 8
          %s1432 = scalar_lea.hbm %s5, %s1431
          %s1433 = sshll.u32 %s1424, 4
          %s1434 = int_to_ptr.vmem [resolvable:$true] %s1433
          %s1435 = sshll.u32 %s1432, 4
          %s1436 = int_to_ptr.hbm [resolvable:$true] %s1435
          %1441 = dma.vmem_to_hbm [thread:$0]  %s1434, 1024, %s1436, %s1421, 128, 128, 8
        $region48: #{tpu_custom_call.1} parent=39 // pred_fallthru
          _
      $region40: #{tpu_custom_call.1} parent=5 // pred_fallthru
        _
      %p1442 = scmp.le.s32.totalorder 2, %s17
      // Predicated region
      $region49: #{tpu_custom_call.1} parent=5 // pred_check
        %p1443 = pneg %p1442
      $region50: #{tpu_custom_call.1} parent=5 // pred_check_branch
        %1445 = sbr.rel (%p1443) target = $region52
      $region51: #{tpu_custom_call.1} parent=5 // pred_region
        %s1446 = ssub.s32 %s17, 2
        // Predicated region
        $region53: #{tpu_custom_call.1} parent=51 // pred_check
          %p1447 = pneg %p156
        $region54: #{tpu_custom_call.1} parent=51 // pred_check_branch
          %1449 = sbr.rel (%p1447) target = $region56
        $region55: #{tpu_custom_call.1} parent=51 // pred_region
          %s1450 = sand.u32 %s141, 1
          %s1451 = scalar_lea.sflag [#allocation8], %s1450
          %s1452 = sand.u32 %s141, 1
          %s1453 = smul.addr %s1452, 64
          %s1454 = scalar_lea.vmem [#allocation9], %s1453
          %1456 = dma.done %s1451, 1024
        $region56: #{tpu_custom_call.1} parent=51 // pred_fallthru
          _
      $region52: #{tpu_custom_call.1} parent=5 // pred_fallthru
        _
    $region6: #{tpu_custom_call.1} parent=1 // loop_footer
      %s21 = sadd.s32 1, %s17
    $region7: #{tpu_custom_call.1} parent=1 // loop_footer_branch
      %16 = sbr.rel target = $region3
    $region8: #{tpu_custom_call.1} parent=1 // loop_exit
      _
    %1457 = vsyncpa [#allocation7], 1
    %s1458 = scalar_lea.sflag [#allocation7], 1
    %1459 = vsyncpa %s1458, 1
    %1460 = vsyncpa [#allocation8], 1
    %s1461 = scalar_lea.sflag [#allocation8], 1
    %1462 = vsyncpa %s1461, 1

</llo_original>
